<compile_context>
chip_gen: v7x
topology: tpu7x:2x2x1
jax: 0.10.0
libtpu: 0.0.40
codegen_flags: <defaults>
</compile_context>

<pallas_src>
import functools

import jax
import jax.numpy as jnp
import numpy as np
from jax import lax
from jax.experimental import pallas as pl
from jax.experimental.pallas import tpu as pltpu


def _conv_out(w, k, s, p=0):
    return int((w - k + 2 * p) / s + 1)


# ----------------------------- fused Pallas kernel ------------------------- #
def _fused_cnn_kernel(p1_ref, w1_ref, b1_ref, w2_ref, b2_ref, w3_ref, b3_ref,
                      w4_ref, b4_ref, out_ref, act1_s, *, geom, compute_dtype):
    """conv1+ReLU -> conv2+ReLU -> flatten -> lin1+ReLU -> lin2, all in VMEM."""
    NB, OH1, OW1, C1, KH2, KW2, S2, OH2, OW2, C2 = geom
    cdt = compute_dtype

    # ---- conv1 + ReLU: one GEMM per conv1 output column `ow1`.
    # Activations land in the VMEM scratch laid out rows=(oh1, n), cols=(ow1, c1)
    # so that every conv2 receptive field below is a contiguous 2-D slice.
    w1 = w1_ref[...]
    b1 = b1_ref[...]
    for w in range(OW1):
        g = jnp.dot(p1_ref[w], w1, preferred_element_type=jnp.float32)
        act1_s[:, w * C1:(w + 1) * C1] = jnp.maximum(g + b1, 0.0)

    # ---- conv2 + ReLU.  Each conv1 activation row is read from the scratch
    # once per (oh2, ki) tap and reused (value slices) for every ow2 window.
    b2 = b2_ref[...]
    accs = [[jnp.zeros((NB, C2), jnp.float32) for _ in range(OW2)]
            for _ in range(OH2)]
    for oh in range(OH2):
        for ki in range(KH2):
            r0 = (oh * S2 + ki) * NB
            row = act1_s[r0:r0 + NB, :].astype(cdt)            # (NB, OW1*C1)
            wk = w2_ref[ki]                                    # (KW2*C1, C2)
            for ow in range(OW2):
                c0 = ow * S2 * C1
                win = row[:, c0:c0 + KW2 * C1]                 # (NB, KW2*C1)
                accs[oh][ow] = accs[oh][ow] + jnp.dot(
                    win, wk, preferred_element_type=jnp.float32)

    # Flatten directly in the (oh2, ow2, c2) order expected by the
    # (pre-permuted) linear1 weights.
    flat = jnp.concatenate(
        [jnp.maximum(accs[oh][ow] + b2, 0.0).astype(cdt)
         for oh in range(OH2) for ow in range(OW2)], axis=1)   # (NB, OH2*OW2*C2)

    # ---- linear1 + ReLU, linear2 (output lanes pre-padded to 128).
    h = jnp.dot(flat, w3_ref[...], preferred_element_type=jnp.float32)
    h = jnp.maximum(h + b3_ref[...], 0.0).astype(cdt)
    o = jnp.dot(h, w4_ref[...], preferred_element_type=jnp.float32) + b4_ref[...]
    out_ref[...] = o.astype(out_ref.dtype)


# ------------------------------ host-side glue ------------------------------ #
def _conv1_patches(x, kh, kw, sh, sw, block_n):
    """x:(N,C,H,W) -> (N//block_n * OW, OH*block_n, C*kh*kw) im2col patches.

    Rows of each (OH*block_n, K) slab are ordered (oh, n-within-block); columns
    are ordered (C, kh, kw) to match the prepared conv1 weight matrix."""
    N, C, H, W = x.shape
    OH = (H - kh) // sh + 1
    OW = (W - kw) // sw + 1
    nblk = N // block_n
    if (kh, kw) == (sh, sw):
        # stride == kernel: windows do not overlap, im2col is a pure reshape.
        xc = x[:, :, :OH * sh, :OW * sw]
        p = xc.reshape(nblk, block_n, C, OH, kh, OW, kw)
        p = p.transpose(0, 5, 3, 1, 2, 4, 6)          # (nblk, OW, OH, n, C, kh, kw)
    else:
        cols = []
        for i in range(kh):
            for j in range(kw):
                cols.append(x[:, :, i:i + sh * OH:sh, j:j + sw * OW:sw])
        p = jnp.stack(cols, axis=0).reshape(kh, kw, nblk, block_n, C, OH, OW)
        p = p.transpose(2, 6, 5, 3, 4, 0, 1)          # (nblk, OW, OH, n, C, kh, kw)
    return p.reshape(nblk * OW, OH * block_n, C * kh * kw), OH, OW


def make_cnn_forward(params, *, width, height, stride_li, kern_li, action_space,
                     compute_dtype=jnp.bfloat16, block_n=None, out_lane_pad=128):
    """Prepare (transpose / permute / pad) weights once and return a jitted
    forward(x) that runs the whole network as a single fused Pallas kernel."""
    KH1 = KW1 = kern_li[0]; S1 = stride_li[0]
    KH2 = KW2 = kern_li[1]; S2 = stride_li[1]
    OH1 = _conv_out(height, KH1, S1)
    OW1 = _conv_out(width, KW1, S1)
    OH2 = _conv_out(OH1, KH2, S2)
    OW2 = _conv_out(OW1, KW2, S2)
    C1 = params["conv1_w"].shape[0]
    C2 = params["conv2_w"].shape[0]
    Cin = params["conv1_w"].shape[1]
    K1 = Cin * KH1 * KW1
    F = OH2 * OW2 * C2
    H1 = params["lin1_w"].shape[0]
    A = action_space
    AP = max(out_lane_pad, A)
    cdt = compute_dtype

    # -- weights pre-transposed / pre-permuted / padded once (hoisted out of forward)
    w1 = params["conv1_w"].reshape(C1, K1).T.astype(cdt)                # (K1, C1)
    b1 = params["conv1_b"].reshape(1, C1).astype(jnp.float32)
    w2 = (params["conv2_w"].transpose(2, 3, 1, 0)                       # (KH2,KW2,C1,C2)
          .reshape(KH2, KW2 * C1, C2).astype(cdt))                      # per-kh tap
    b2 = params["conv2_b"].reshape(1, C2).astype(jnp.float32)
    # linear1: re-order from NCHW flatten (c, oh, ow) to the kernel's (oh, ow, c)
    w3 = (params["lin1_w"].reshape(H1, C2, OH2, OW2)
          .transpose(2, 3, 1, 0).reshape(F, H1).astype(cdt))            # (F, 512)
    b3 = params["lin1_b"].reshape(1, H1).astype(jnp.float32)
    # linear2: transpose + zero-pad to 128 lanes -> the only HBM store is lane-dense
    w4 = jnp.pad(params["lin2_w"].T, ((0, 0), (0, AP - A))).astype(cdt)  # (512, AP)
    b4 = jnp.pad(params["lin2_b"], (0, AP - A)).reshape(1, AP).astype(jnp.float32)

    def forward(x, w1, b1, w2, b2, w3, b3, w4, b4):
        N = x.shape[0]
        nb = N if block_n is None else min(block_n, N)
        assert N % nb == 0 and (nb == N or nb % 8 == 0), (N, nb)
        nblk = N // nb
        p1, oh1, ow1 = _conv1_patches(x.astype(cdt), KH1, KW1, S1, S1, nb)
        assert (oh1, ow1) == (OH1, OW1), ((oh1, ow1), (OH1, OW1))
        M1 = OH1 * nb

        geom = (nb, OH1, OW1, C1, KH2, KW2, S2, OH2, OW2, C2)
        kernel = functools.partial(_fused_cnn_kernel, geom=geom, compute_dtype=cdt)

        out = pl.pallas_call(
            kernel,
            out_shape=jax.ShapeDtypeStruct((N, AP), jnp.float32),
            grid=(nblk,),
            in_specs=[
                pl.BlockSpec((OW1, M1, K1), lambda i: (i, 0, 0)),        # conv1 patches
                pl.BlockSpec((K1, C1), lambda i: (0, 0)),                # conv1 weight
                pl.BlockSpec((1, C1), lambda i: (0, 0)),
                pl.BlockSpec((KH2, KW2 * C1, C2), lambda i: (0, 0, 0)),  # conv2 taps
                pl.BlockSpec((1, C2), lambda i: (0, 0)),
                pl.BlockSpec((F, H1), lambda i: (0, 0)),                 # linear1
                pl.BlockSpec((1, H1), lambda i: (0, 0)),
                pl.BlockSpec((H1, AP), lambda i: (0, 0)),                # linear2 (padded)
                pl.BlockSpec((1, AP), lambda i: (0, 0)),
            ],
            out_specs=pl.BlockSpec((nb, AP), lambda i: (i, 0)),
            scratch_shapes=[pltpu.VMEM((M1, OW1 * C1), jnp.float32)],    # conv1 acts
            compiler_params=pltpu.CompilerParams(
                dimension_semantics=("parallel",)),
        )(p1, w1, b1, w2, b2, w3, b3, w4, b4)
        return out[:, :A]

    jitted = jax.jit(forward)
    return lambda x: jitted(x, w1, b1, w2, b2, w3, b3, w4, b4)


# --------------------------------- params ----------------------------------- #
def init_cnn_params(key, channels, action_space, width, height,
                    num_layers=3, stride_li=(8, 2, 2), kern_li=(8, 3, 3)):
    a, b = width, height
    for i in range(num_layers - 1):
        a = _conv_out(a, kern_li[i], stride_li[i])
        b = _conv_out(b, kern_li[i], stride_li[i])
    flat = 64 * a * b
    ks = jax.random.split(key, 10)
    s = 0.05
    return {
        "conv1_w": s * jax.random.normal(ks[0], (32, channels, kern_li[0], kern_li[0]), jnp.float32),
        "conv1_b": s * jax.random.normal(ks[1], (32,), jnp.float32),
        "conv2_w": s * jax.random.normal(ks[2], (64, 32, kern_li[1], kern_li[1]), jnp.float32),
        "conv2_b": s * jax.random.normal(ks[3], (64,), jnp.float32),
        # conv3 exists in the PyTorch __init__ but is never used in forward().
        "conv3_w": s * jax.random.normal(ks[4], (64, 64, kern_li[2], kern_li[2]), jnp.float32),
        "conv3_b": s * jax.random.normal(ks[5], (64,), jnp.float32),
        "lin1_w": s * jax.random.normal(ks[6], (512, flat), jnp.float32),
        "lin1_b": s * jax.random.normal(ks[7], (512,), jnp.float32),
        "lin2_w": s * jax.random.normal(ks[8], (action_space, 512), jnp.float32),
        "lin2_b": s * jax.random.normal(ks[9], (action_space,), jnp.float32),
    }


# ------------------------------ f32 reference ------------------------------- #
def cnn_reference(params, x, stride_li):
    def conv(x, w, b, s):
        y = lax.conv_general_dilated(
            x, w, (s, s), "VALID",
            dimension_numbers=("NCHW", "OIHW", "NCHW"),
            precision=lax.Precision.HIGHEST)
        return jax.nn.relu(y + b.reshape(1, -1, 1, 1))

    x = conv(x, params["conv1_w"], params["conv1_b"], stride_li[0])
    x = conv(x, params["conv2_w"], params["conv2_b"], stride_li[1])
    x = x.reshape(x.shape[0], -1)
    x = jax.nn.relu(x @ params["lin1_w"].T + params["lin1_b"])
    return x @ params["lin2_w"].T + params["lin2_b"]


# ---------------------------------- main ------------------------------------ #
if __name__ == "__main__":
    # conv1(k=8,s=8): 48x40 -> 6x5 ; conv2(k=3,s=2): 6x5 -> 2x2
    # -> flatten 64*2*2 = 256 -> linear1(256,512) -> linear2(512,6)
    batch, channels, width, height, action_space = 2, 4, 40, 48, 6
    stride_li, kern_li = (8, 2, 2), (8, 3, 3)

    key = jax.random.PRNGKey(0)
    pkey, xkey = jax.random.split(key)
    params = init_cnn_params(pkey, channels, action_space, width, height,
                             num_layers=3, stride_li=stride_li, kern_li=kern_li)
    x = jax.random.normal(xkey, (batch, channels, height, width), jnp.float32)

    fwd = make_cnn_forward(params, width=width, height=height,
                           stride_li=stride_li, kern_li=kern_li,
                           action_space=action_space,
                           compute_dtype=jnp.bfloat16)

    out = jax.block_until_ready(fwd(x))
    ref = jax.block_until_ready(cnn_reference(params, x, stride_li))

    assert out.shape == (batch, action_space), out.shape
    # bf16 matmul operands (f32 accumulation) vs. pure-f32 reference:
    # observed error is ~1e-3; 2e-2 tolerance leaves ample margin.
    np.testing.assert_allclose(np.asarray(out), np.asarray(ref), rtol=2e-2, atol=2e-2)
    print("KERNEL_OK")
</pallas_src>

<mosaic_0001>
module attributes {stable_mosaic.version = 11 : i64} {
  func.func @_fused_cnn_kernel(%arg0: i32, %arg1: memref<5x12x256xbf16, #tpu.memory_space<vmem>>, %arg2: memref<256x32xbf16, #tpu.memory_space<vmem>>, %arg3: memref<1x32xf32, #tpu.memory_space<vmem>>, %arg4: memref<3x96x64xbf16, #tpu.memory_space<vmem>>, %arg5: memref<1x64xf32, #tpu.memory_space<vmem>>, %arg6: memref<256x512xbf16, #tpu.memory_space<vmem>>, %arg7: memref<1x512xf32, #tpu.memory_space<vmem>>, %arg8: memref<512x128xbf16, #tpu.memory_space<vmem>>, %arg9: memref<1x128xf32, #tpu.memory_space<vmem>>, %arg10: memref<2x128xf32, #tpu.memory_space<vmem>>, %arg11: memref<12x160xf32, #tpu.memory_space<vmem>>) attributes {dimension_semantics = [#tpu.dimension_semantics<parallel>], iteration_bounds = array<i64: 1>, scalar_prefetch = 0 : i64, scratch_operands = 1 : i64, tpu.core_type = #tpu.core_type<tc>, window_params = [{transform_indices = @transform_0, window_bounds = array<i64: 5, 12, 256>}, {pipeline_mode = #tpu.pipeline_mode<synchronous>, transform_indices = @transform_1, window_bounds = array<i64: 256, 32>}, {pipeline_mode = #tpu.pipeline_mode<synchronous>, transform_indices = @transform_2, window_bounds = array<i64: 1, 32>}, {pipeline_mode = #tpu.pipeline_mode<synchronous>, transform_indices = @transform_3, window_bounds = array<i64: 3, 96, 64>}, {pipeline_mode = #tpu.pipeline_mode<synchronous>, transform_indices = @transform_4, window_bounds = array<i64: 1, 64>}, {pipeline_mode = #tpu.pipeline_mode<synchronous>, transform_indices = @transform_5, window_bounds = array<i64: 256, 512>}, {pipeline_mode = #tpu.pipeline_mode<synchronous>, transform_indices = @transform_6, window_bounds = array<i64: 1, 512>}, {pipeline_mode = #tpu.pipeline_mode<synchronous>, transform_indices = @transform_7, window_bounds = array<i64: 512, 128>}, {pipeline_mode = #tpu.pipeline_mode<synchronous>, transform_indices = @transform_8, window_bounds = array<i64: 1, 128>}, {transform_indices = @transform_9, window_bounds = array<i64: 2, 128>}]} {
    %c0 = arith.constant 0 : index
    %c0_0 = arith.constant 0 : index
    %0 = vector.load %arg2[%c0, %c0_0] : memref<256x32xbf16, #tpu.memory_space<vmem>>, vector<256x32xbf16>
    %c0_1 = arith.constant 0 : index
    %c0_2 = arith.constant 0 : index
    %1 = vector.load %arg3[%c0_1, %c0_2] : memref<1x32xf32, #tpu.memory_space<vmem>>, vector<1x32xf32>
    %c0_3 = arith.constant 0 : index
    %c0_4 = arith.constant 0 : index
    %c0_5 = arith.constant 0 : index
    %2 = vector.load %arg1[%c0_3, %c0_4, %c0_5] : memref<5x12x256xbf16, #tpu.memory_space<vmem>>, vector<1x12x256xbf16>
    %3 = vector.shape_cast %2 : vector<1x12x256xbf16> to vector<12x256xbf16>
    %cst = arith.constant dense<0.000000e+00> : vector<12x32xf32>
    %4 = tpu.matmul %3, %0, %cst {dimension_numbers = #tpu.dot_dimension_numbers<[1], [0], [0], [1], [0, 0, 1, 1], [], []>} : vector<12x256xbf16>, vector<256x32xbf16>, vector<12x32xf32> -> vector<12x32xf32>
    %5 = vector.broadcast %1 : vector<1x32xf32> to vector<12x32xf32>
    %6 = arith.addf %4, %5 : vector<12x32xf32>
    %cst_6 = arith.constant 0.000000e+00 : f32
    %7 = vector.broadcast %cst_6 : f32 to vector<12x32xf32>
    %8 = arith.maximumf %6, %7 : vector<12x32xf32>
    %c0_7 = arith.constant 0 : index
    %c0_8 = arith.constant 0 : index
    %9 = vector.load %arg11[%c0_7, %c0_8] : memref<12x160xf32, #tpu.memory_space<vmem>>, vector<12x32xf32>
    tpu.vector_store %arg11[%c0_7, %c0_8], %8 {strides = array<i32>} : memref<12x160xf32, #tpu.memory_space<vmem>>, vector<12x32xf32>,
    %c1 = arith.constant 1 : index
    %c0_9 = arith.constant 0 : index
    %c0_10 = arith.constant 0 : index
    %10 = vector.load %arg1[%c1, %c0_9, %c0_10] : memref<5x12x256xbf16, #tpu.memory_space<vmem>>, vector<1x12x256xbf16>
    %11 = vector.shape_cast %10 : vector<1x12x256xbf16> to vector<12x256xbf16>
    %cst_11 = arith.constant dense<0.000000e+00> : vector<12x32xf32>
    %12 = tpu.matmul %11, %0, %cst_11 {dimension_numbers = #tpu.dot_dimension_numbers<[1], [0], [0], [1], [0, 0, 1, 1], [], []>} : vector<12x256xbf16>, vector<256x32xbf16>, vector<12x32xf32> -> vector<12x32xf32>
    %13 = vector.broadcast %1 : vector<1x32xf32> to vector<12x32xf32>
    %14 = arith.addf %12, %13 : vector<12x32xf32>
    %cst_12 = arith.constant 0.000000e+00 : f32
    %15 = vector.broadcast %cst_12 : f32 to vector<12x32xf32>
    %16 = arith.maximumf %14, %15 : vector<12x32xf32>
    %c0_13 = arith.constant 0 : index
    %c32 = arith.constant 32 : index
    %17 = vector.load %arg11[%c0_13, %c32] : memref<12x160xf32, #tpu.memory_space<vmem>>, vector<12x32xf32>
    tpu.vector_store %arg11[%c0_13, %c32], %16 {strides = array<i32>} : memref<12x160xf32, #tpu.memory_space<vmem>>, vector<12x32xf32>,
    %c2 = arith.constant 2 : index
    %c0_14 = arith.constant 0 : index
    %c0_15 = arith.constant 0 : index
    %18 = vector.load %arg1[%c2, %c0_14, %c0_15] : memref<5x12x256xbf16, #tpu.memory_space<vmem>>, vector<1x12x256xbf16>
    %19 = vector.shape_cast %18 : vector<1x12x256xbf16> to vector<12x256xbf16>
    %cst_16 = arith.constant dense<0.000000e+00> : vector<12x32xf32>
    %20 = tpu.matmul %19, %0, %cst_16 {dimension_numbers = #tpu.dot_dimension_numbers<[1], [0], [0], [1], [0, 0, 1, 1], [], []>} : vector<12x256xbf16>, vector<256x32xbf16>, vector<12x32xf32> -> vector<12x32xf32>
    %21 = vector.broadcast %1 : vector<1x32xf32> to vector<12x32xf32>
    %22 = arith.addf %20, %21 : vector<12x32xf32>
    %cst_17 = arith.constant 0.000000e+00 : f32
    %23 = vector.broadcast %cst_17 : f32 to vector<12x32xf32>
    %24 = arith.maximumf %22, %23 : vector<12x32xf32>
    %c0_18 = arith.constant 0 : index
    %c64 = arith.constant 64 : index
    %25 = vector.load %arg11[%c0_18, %c64] : memref<12x160xf32, #tpu.memory_space<vmem>>, vector<12x32xf32>
    tpu.vector_store %arg11[%c0_18, %c64], %24 {strides = array<i32>} : memref<12x160xf32, #tpu.memory_space<vmem>>, vector<12x32xf32>,
    %c3 = arith.constant 3 : index
    %c0_19 = arith.constant 0 : index
    %c0_20 = arith.constant 0 : index
    %26 = vector.load %arg1[%c3, %c0_19, %c0_20] : memref<5x12x256xbf16, #tpu.memory_space<vmem>>, vector<1x12x256xbf16>
    %27 = vector.shape_cast %26 : vector<1x12x256xbf16> to vector<12x256xbf16>
    %cst_21 = arith.constant dense<0.000000e+00> : vector<12x32xf32>
    %28 = tpu.matmul %27, %0, %cst_21 {dimension_numbers = #tpu.dot_dimension_numbers<[1], [0], [0], [1], [0, 0, 1, 1], [], []>} : vector<12x256xbf16>, vector<256x32xbf16>, vector<12x32xf32> -> vector<12x32xf32>
    %29 = vector.broadcast %1 : vector<1x32xf32> to vector<12x32xf32>
    %30 = arith.addf %28, %29 : vector<12x32xf32>
    %cst_22 = arith.constant 0.000000e+00 : f32
    %31 = vector.broadcast %cst_22 : f32 to vector<12x32xf32>
    %32 = arith.maximumf %30, %31 : vector<12x32xf32>
    %c0_23 = arith.constant 0 : index
    %c96 = arith.constant 96 : index
    %33 = vector.load %arg11[%c0_23, %c96] : memref<12x160xf32, #tpu.memory_space<vmem>>, vector<12x32xf32>
    tpu.vector_store %arg11[%c0_23, %c96], %32 {strides = array<i32>} : memref<12x160xf32, #tpu.memory_space<vmem>>, vector<12x32xf32>,
    %c4 = arith.constant 4 : index
    %c0_24 = arith.constant 0 : index
    %c0_25 = arith.constant 0 : index
    %34 = vector.load %arg1[%c4, %c0_24, %c0_25] : memref<5x12x256xbf16, #tpu.memory_space<vmem>>, vector<1x12x256xbf16>
    %35 = vector.shape_cast %34 : vector<1x12x256xbf16> to vector<12x256xbf16>
    %cst_26 = arith.constant dense<0.000000e+00> : vector<12x32xf32>
    %36 = tpu.matmul %35, %0, %cst_26 {dimension_numbers = #tpu.dot_dimension_numbers<[1], [0], [0], [1], [0, 0, 1, 1], [], []>} : vector<12x256xbf16>, vector<256x32xbf16>, vector<12x32xf32> -> vector<12x32xf32>
    %37 = vector.broadcast %1 : vector<1x32xf32> to vector<12x32xf32>
    %38 = arith.addf %36, %37 : vector<12x32xf32>
    %cst_27 = arith.constant 0.000000e+00 : f32
    %39 = vector.broadcast %cst_27 : f32 to vector<12x32xf32>
    %40 = arith.maximumf %38, %39 : vector<12x32xf32>
    %c0_28 = arith.constant 0 : index
    %c128 = arith.constant 128 : index
    %41 = vector.load %arg11[%c0_28, %c128] : memref<12x160xf32, #tpu.memory_space<vmem>>, vector<12x32xf32>
    tpu.vector_store %arg11[%c0_28, %c128], %40 {strides = array<i32>} : memref<12x160xf32, #tpu.memory_space<vmem>>, vector<12x32xf32>,
    %c0_29 = arith.constant 0 : index
    %c0_30 = arith.constant 0 : index
    %42 = vector.load %arg5[%c0_29, %c0_30] : memref<1x64xf32, #tpu.memory_space<vmem>>, vector<1x64xf32>
    %cst_31 = arith.constant 0.000000e+00 : f32
    %43 = vector.broadcast %cst_31 : f32 to vector<2x64xf32>
    %cst_32 = arith.constant 0.000000e+00 : f32
    %44 = vector.broadcast %cst_32 : f32 to vector<2x64xf32>
    %cst_33 = arith.constant 0.000000e+00 : f32
    %45 = vector.broadcast %cst_33 : f32 to vector<2x64xf32>
    %cst_34 = arith.constant 0.000000e+00 : f32
    %46 = vector.broadcast %cst_34 : f32 to vector<2x64xf32>
    %c0_35 = arith.constant 0 : index
    %c0_36 = arith.constant 0 : index
    %47 = vector.load %arg11[%c0_35, %c0_36] : memref<12x160xf32, #tpu.memory_space<vmem>>, vector<2x160xf32>
    %48 = arith.truncf %47 : vector<2x160xf32> to vector<2x160xbf16>
    %c0_37 = arith.constant 0 : index
    %c0_38 = arith.constant 0 : index
    %c0_39 = arith.constant 0 : index
    %49 = vector.load %arg4[%c0_37, %c0_38, %c0_39] : memref<3x96x64xbf16, #tpu.memory_space<vmem>>, vector<1x96x64xbf16>
    %50 = vector.shape_cast %49 : vector<1x96x64xbf16> to vector<96x64xbf16>
    %51 = vector.extract_strided_slice %48 {offsets = [0, 0], sizes = [2, 96], strides = [1, 1]} : vector<2x160xbf16> to vector<2x96xbf16>
    %cst_40 = arith.constant dense<0.000000e+00> : vector<2x64xf32>
    %52 = tpu.matmul %51, %50, %cst_40 {dimension_numbers = #tpu.dot_dimension_numbers<[1], [0], [0], [1], [0, 0, 1, 1], [], []>} : vector<2x96xbf16>, vector<96x64xbf16>, vector<2x64xf32> -> vector<2x64xf32>
    %53 = arith.addf %43, %52 : vector<2x64xf32>
    %54 = vector.extract_strided_slice %48 {offsets = [0, 64], sizes = [2, 96], strides = [1, 1]} : vector<2x160xbf16> to vector<2x96xbf16>
    %cst_41 = arith.constant dense<0.000000e+00> : vector<2x64xf32>
    %55 = tpu.matmul %54, %50, %cst_41 {dimension_numbers = #tpu.dot_dimension_numbers<[1], [0], [0], [1], [0, 0, 1, 1], [], []>} : vector<2x96xbf16>, vector<96x64xbf16>, vector<2x64xf32> -> vector<2x64xf32>
    %56 = arith.addf %44, %55 : vector<2x64xf32>
    %c2_42 = arith.constant 2 : index
    %c0_43 = arith.constant 0 : index
    %57 = vector.load %arg11[%c2_42, %c0_43] : memref<12x160xf32, #tpu.memory_space<vmem>>, vector<2x160xf32>
    %58 = arith.truncf %57 : vector<2x160xf32> to vector<2x160xbf16>
    %c1_44 = arith.constant 1 : index
    %c0_45 = arith.constant 0 : index
    %c0_46 = arith.constant 0 : index
    %59 = vector.load %arg4[%c1_44, %c0_45, %c0_46] : memref<3x96x64xbf16, #tpu.memory_space<vmem>>, vector<1x96x64xbf16>
    %60 = vector.shape_cast %59 : vector<1x96x64xbf16> to vector<96x64xbf16>
    %61 = vector.extract_strided_slice %58 {offsets = [0, 0], sizes = [2, 96], strides = [1, 1]} : vector<2x160xbf16> to vector<2x96xbf16>
    %cst_47 = arith.constant dense<0.000000e+00> : vector<2x64xf32>
    %62 = tpu.matmul %61, %60, %cst_47 {dimension_numbers = #tpu.dot_dimension_numbers<[1], [0], [0], [1], [0, 0, 1, 1], [], []>} : vector<2x96xbf16>, vector<96x64xbf16>, vector<2x64xf32> -> vector<2x64xf32>
    %63 = arith.addf %53, %62 : vector<2x64xf32>
    %64 = vector.extract_strided_slice %58 {offsets = [0, 64], sizes = [2, 96], strides = [1, 1]} : vector<2x160xbf16> to vector<2x96xbf16>
    %cst_48 = arith.constant dense<0.000000e+00> : vector<2x64xf32>
    %65 = tpu.matmul %64, %60, %cst_48 {dimension_numbers = #tpu.dot_dimension_numbers<[1], [0], [0], [1], [0, 0, 1, 1], [], []>} : vector<2x96xbf16>, vector<96x64xbf16>, vector<2x64xf32> -> vector<2x64xf32>
    %66 = arith.addf %56, %65 : vector<2x64xf32>
    %c4_49 = arith.constant 4 : index
    %c0_50 = arith.constant 0 : index
    %67 = vector.load %arg11[%c4_49, %c0_50] : memref<12x160xf32, #tpu.memory_space<vmem>>, vector<2x160xf32>
    %68 = arith.truncf %67 : vector<2x160xf32> to vector<2x160xbf16>
    %c2_51 = arith.constant 2 : index
    %c0_52 = arith.constant 0 : index
    %c0_53 = arith.constant 0 : index
    %69 = vector.load %arg4[%c2_51, %c0_52, %c0_53] : memref<3x96x64xbf16, #tpu.memory_space<vmem>>, vector<1x96x64xbf16>
    %70 = vector.shape_cast %69 : vector<1x96x64xbf16> to vector<96x64xbf16>
    %71 = vector.extract_strided_slice %68 {offsets = [0, 0], sizes = [2, 96], strides = [1, 1]} : vector<2x160xbf16> to vector<2x96xbf16>
    %cst_54 = arith.constant dense<0.000000e+00> : vector<2x64xf32>
    %72 = tpu.matmul %71, %70, %cst_54 {dimension_numbers = #tpu.dot_dimension_numbers<[1], [0], [0], [1], [0, 0, 1, 1], [], []>} : vector<2x96xbf16>, vector<96x64xbf16>, vector<2x64xf32> -> vector<2x64xf32>
    %73 = arith.addf %63, %72 : vector<2x64xf32>
    %74 = vector.extract_strided_slice %68 {offsets = [0, 64], sizes = [2, 96], strides = [1, 1]} : vector<2x160xbf16> to vector<2x96xbf16>
    %cst_55 = arith.constant dense<0.000000e+00> : vector<2x64xf32>
    %75 = tpu.matmul %74, %70, %cst_55 {dimension_numbers = #tpu.dot_dimension_numbers<[1], [0], [0], [1], [0, 0, 1, 1], [], []>} : vector<2x96xbf16>, vector<96x64xbf16>, vector<2x64xf32> -> vector<2x64xf32>
    %76 = arith.addf %66, %75 : vector<2x64xf32>
    %c4_56 = arith.constant 4 : index
    %c0_57 = arith.constant 0 : index
    %77 = vector.load %arg11[%c4_56, %c0_57] : memref<12x160xf32, #tpu.memory_space<vmem>>, vector<2x160xf32>
    %78 = arith.truncf %77 : vector<2x160xf32> to vector<2x160xbf16>
    %c0_58 = arith.constant 0 : index
    %c0_59 = arith.constant 0 : index
    %c0_60 = arith.constant 0 : index
    %79 = vector.load %arg4[%c0_58, %c0_59, %c0_60] : memref<3x96x64xbf16, #tpu.memory_space<vmem>>, vector<1x96x64xbf16>
    %80 = vector.shape_cast %79 : vector<1x96x64xbf16> to vector<96x64xbf16>
    %81 = vector.extract_strided_slice %78 {offsets = [0, 0], sizes = [2, 96], strides = [1, 1]} : vector<2x160xbf16> to vector<2x96xbf16>
    %cst_61 = arith.constant dense<0.000000e+00> : vector<2x64xf32>
    %82 = tpu.matmul %81, %80, %cst_61 {dimension_numbers = #tpu.dot_dimension_numbers<[1], [0], [0], [1], [0, 0, 1, 1], [], []>} : vector<2x96xbf16>, vector<96x64xbf16>, vector<2x64xf32> -> vector<2x64xf32>
    %83 = arith.addf %45, %82 : vector<2x64xf32>
    %84 = vector.extract_strided_slice %78 {offsets = [0, 64], sizes = [2, 96], strides = [1, 1]} : vector<2x160xbf16> to vector<2x96xbf16>
    %cst_62 = arith.constant dense<0.000000e+00> : vector<2x64xf32>
    %85 = tpu.matmul %84, %80, %cst_62 {dimension_numbers = #tpu.dot_dimension_numbers<[1], [0], [0], [1], [0, 0, 1, 1], [], []>} : vector<2x96xbf16>, vector<96x64xbf16>, vector<2x64xf32> -> vector<2x64xf32>
    %86 = arith.addf %46, %85 : vector<2x64xf32>
    %c6 = arith.constant 6 : index
    %c0_63 = arith.constant 0 : index
    %87 = vector.load %arg11[%c6, %c0_63] : memref<12x160xf32, #tpu.memory_space<vmem>>, vector<2x160xf32>
    %88 = arith.truncf %87 : vector<2x160xf32> to vector<2x160xbf16>
    %c1_64 = arith.constant 1 : index
    %c0_65 = arith.constant 0 : index
    %c0_66 = arith.constant 0 : index
    %89 = vector.load %arg4[%c1_64, %c0_65, %c0_66] : memref<3x96x64xbf16, #tpu.memory_space<vmem>>, vector<1x96x64xbf16>
    %90 = vector.shape_cast %89 : vector<1x96x64xbf16> to vector<96x64xbf16>
    %91 = vector.extract_strided_slice %88 {offsets = [0, 0], sizes = [2, 96], strides = [1, 1]} : vector<2x160xbf16> to vector<2x96xbf16>
    %cst_67 = arith.constant dense<0.000000e+00> : vector<2x64xf32>
    %92 = tpu.matmul %91, %90, %cst_67 {dimension_numbers = #tpu.dot_dimension_numbers<[1], [0], [0], [1], [0, 0, 1, 1], [], []>} : vector<2x96xbf16>, vector<96x64xbf16>, vector<2x64xf32> -> vector<2x64xf32>
    %93 = arith.addf %83, %92 : vector<2x64xf32>
    %94 = vector.extract_strided_slice %88 {offsets = [0, 64], sizes = [2, 96], strides = [1, 1]} : vector<2x160xbf16> to vector<2x96xbf16>
    %cst_68 = arith.constant dense<0.000000e+00> : vector<2x64xf32>
    %95 = tpu.matmul %94, %90, %cst_68 {dimension_numbers = #tpu.dot_dimension_numbers<[1], [0], [0], [1], [0, 0, 1, 1], [], []>} : vector<2x96xbf16>, vector<96x64xbf16>, vector<2x64xf32> -> vector<2x64xf32>
    %96 = arith.addf %86, %95 : vector<2x64xf32>
    %c8 = arith.constant 8 : index
    %c0_69 = arith.constant 0 : index
    %97 = vector.load %arg11[%c8, %c0_69] : memref<12x160xf32, #tpu.memory_space<vmem>>, vector<2x160xf32>
    %98 = arith.truncf %97 : vector<2x160xf32> to vector<2x160xbf16>
    %c2_70 = arith.constant 2 : index
    %c0_71 = arith.constant 0 : index
    %c0_72 = arith.constant 0 : index
    %99 = vector.load %arg4[%c2_70, %c0_71, %c0_72] : memref<3x96x64xbf16, #tpu.memory_space<vmem>>, vector<1x96x64xbf16>
    %100 = vector.shape_cast %99 : vector<1x96x64xbf16> to vector<96x64xbf16>
    %101 = vector.extract_strided_slice %98 {offsets = [0, 0], sizes = [2, 96], strides = [1, 1]} : vector<2x160xbf16> to vector<2x96xbf16>
    %cst_73 = arith.constant dense<0.000000e+00> : vector<2x64xf32>
    %102 = tpu.matmul %101, %100, %cst_73 {dimension_numbers = #tpu.dot_dimension_numbers<[1], [0], [0], [1], [0, 0, 1, 1], [], []>} : vector<2x96xbf16>, vector<96x64xbf16>, vector<2x64xf32> -> vector<2x64xf32>
    %103 = arith.addf %93, %102 : vector<2x64xf32>
    %104 = vector.extract_strided_slice %98 {offsets = [0, 64], sizes = [2, 96], strides = [1, 1]} : vector<2x160xbf16> to vector<2x96xbf16>
    %cst_74 = arith.constant dense<0.000000e+00> : vector<2x64xf32>
    %105 = tpu.matmul %104, %100, %cst_74 {dimension_numbers = #tpu.dot_dimension_numbers<[1], [0], [0], [1], [0, 0, 1, 1], [], []>} : vector<2x96xbf16>, vector<96x64xbf16>, vector<2x64xf32> -> vector<2x64xf32>
    %106 = arith.addf %96, %105 : vector<2x64xf32>
    %107 = vector.broadcast %42 : vector<1x64xf32> to vector<2x64xf32>
    %108 = arith.addf %73, %107 : vector<2x64xf32>
    %cst_75 = arith.constant 0.000000e+00 : f32
    %109 = vector.broadcast %cst_75 : f32 to vector<2x64xf32>
    %110 = arith.maximumf %108, %109 : vector<2x64xf32>
    %111 = arith.truncf %110 : vector<2x64xf32> to vector<2x64xbf16>
    %112 = vector.broadcast %42 : vector<1x64xf32> to vector<2x64xf32>
    %113 = arith.addf %76, %112 : vector<2x64xf32>
    %cst_76 = arith.constant 0.000000e+00 : f32
    %114 = vector.broadcast %cst_76 : f32 to vector<2x64xf32>
    %115 = arith.maximumf %113, %114 : vector<2x64xf32>
    %116 = arith.truncf %115 : vector<2x64xf32> to vector<2x64xbf16>
    %117 = vector.broadcast %42 : vector<1x64xf32> to vector<2x64xf32>
    %118 = arith.addf %103, %117 : vector<2x64xf32>
    %cst_77 = arith.constant 0.000000e+00 : f32
    %119 = vector.broadcast %cst_77 : f32 to vector<2x64xf32>
    %120 = arith.maximumf %118, %119 : vector<2x64xf32>
    %121 = arith.truncf %120 : vector<2x64xf32> to vector<2x64xbf16>
    %122 = vector.broadcast %42 : vector<1x64xf32> to vector<2x64xf32>
    %123 = arith.addf %106, %122 : vector<2x64xf32>
    %cst_78 = arith.constant 0.000000e+00 : f32
    %124 = vector.broadcast %cst_78 : f32 to vector<2x64xf32>
    %125 = arith.maximumf %123, %124 : vector<2x64xf32>
    %126 = arith.truncf %125 : vector<2x64xf32> to vector<2x64xbf16>
    %127 = tpu.concatenate %111, %116, %121, %126 in 1 : vector<2x64xbf16>, vector<2x64xbf16>, vector<2x64xbf16>, vector<2x64xbf16> -> vector<2x256xbf16>
    %c0_79 = arith.constant 0 : index
    %c0_80 = arith.constant 0 : index
    %128 = vector.load %arg6[%c0_79, %c0_80] : memref<256x512xbf16, #tpu.memory_space<vmem>>, vector<256x512xbf16>
    %cst_81 = arith.constant dense<0.000000e+00> : vector<2x512xf32>
    %129 = tpu.matmul %127, %128, %cst_81 {dimension_numbers = #tpu.dot_dimension_numbers<[1], [0], [0], [1], [0, 0, 1, 1], [], []>} : vector<2x256xbf16>, vector<256x512xbf16>, vector<2x512xf32> -> vector<2x512xf32>
    %c0_82 = arith.constant 0 : index
    %c0_83 = arith.constant 0 : index
    %130 = vector.load %arg7[%c0_82, %c0_83] : memref<1x512xf32, #tpu.memory_space<vmem>>, vector<1x512xf32>
    %131 = vector.broadcast %130 : vector<1x512xf32> to vector<2x512xf32>
    %132 = arith.addf %129, %131 : vector<2x512xf32>
    %cst_84 = arith.constant 0.000000e+00 : f32
    %133 = vector.broadcast %cst_84 : f32 to vector<2x512xf32>
    %134 = arith.maximumf %132, %133 : vector<2x512xf32>
    %135 = arith.truncf %134 : vector<2x512xf32> to vector<2x512xbf16>
    %c0_85 = arith.constant 0 : index
    %c0_86 = arith.constant 0 : index
    %136 = vector.load %arg8[%c0_85, %c0_86] : memref<512x128xbf16, #tpu.memory_space<vmem>>, vector<512x128xbf16>
    %cst_87 = arith.constant dense<0.000000e+00> : vector<2x128xf32>
    %137 = tpu.matmul %135, %136, %cst_87 {dimension_numbers = #tpu.dot_dimension_numbers<[1], [0], [0], [1], [0, 0, 1, 1], [], []>} : vector<2x512xbf16>, vector<512x128xbf16>, vector<2x128xf32> -> vector<2x128xf32>
    %c0_88 = arith.constant 0 : index
    %c0_89 = arith.constant 0 : index
    %138 = vector.load %arg9[%c0_88, %c0_89] : memref<1x128xf32, #tpu.memory_space<vmem>>, vector<1x128xf32>
    %139 = vector.broadcast %138 : vector<1x128xf32> to vector<2x128xf32>
    %140 = arith.addf %137, %139 : vector<2x128xf32>
    %c0_90 = arith.constant 0 : index
    %c0_91 = arith.constant 0 : index
    %141 = vector.load %arg10[%c0_90, %c0_91] : memref<2x128xf32, #tpu.memory_space<vmem>>, vector<2x128xf32>
    tpu.vector_store %arg10[%c0_90, %c0_91], %140 {strides = array<i32>} : memref<2x128xf32, #tpu.memory_space<vmem>>, vector<2x128xf32>,
    return
  }
  func.func @transform_0(%arg0: i32) -> (i32, i32, i32) {
    %c0_i32 = arith.constant 0 : i32
    %c0_i32_0 = arith.constant 0 : i32
    %c0_i32_1 = arith.constant 0 : i32
    return %arg0, %c0_i32, %c0_i32_0 : i32, i32, i32
  }
  func.func @transform_1(%arg0: i32) -> (i32, i32) {
    %c0_i32 = arith.constant 0 : i32
    %c0_i32_0 = arith.constant 0 : i32
    %c0_i32_1 = arith.constant 0 : i32
    return %c0_i32, %c0_i32_0 : i32, i32
  }
  func.func @transform_2(%arg0: i32) -> (i32, i32) {
    %c0_i32 = arith.constant 0 : i32
    %c0_i32_0 = arith.constant 0 : i32
    %c0_i32_1 = arith.constant 0 : i32
    return %c0_i32, %c0_i32_0 : i32, i32
  }
  func.func @transform_3(%arg0: i32) -> (i32, i32, i32) {
    %c0_i32 = arith.constant 0 : i32
    %c0_i32_0 = arith.constant 0 : i32
    %c0_i32_1 = arith.constant 0 : i32
    %c0_i32_2 = arith.constant 0 : i32
    return %c0_i32, %c0_i32_0, %c0_i32_1 : i32, i32, i32
  }
  func.func @transform_4(%arg0: i32) -> (i32, i32) {
    %c0_i32 = arith.constant 0 : i32
    %c0_i32_0 = arith.constant 0 : i32
    %c0_i32_1 = arith.constant 0 : i32
    return %c0_i32, %c0_i32_0 : i32, i32
  }
  func.func @transform_5(%arg0: i32) -> (i32, i32) {
    %c0_i32 = arith.constant 0 : i32
    %c0_i32_0 = arith.constant 0 : i32
    %c0_i32_1 = arith.constant 0 : i32
    return %c0_i32, %c0_i32_0 : i32, i32
  }
  func.func @transform_6(%arg0: i32) -> (i32, i32) {
    %c0_i32 = arith.constant 0 : i32
    %c0_i32_0 = arith.constant 0 : i32
    %c0_i32_1 = arith.constant 0 : i32
    return %c0_i32, %c0_i32_0 : i32, i32
  }
  func.func @transform_7(%arg0: i32) -> (i32, i32) {
    %c0_i32 = arith.constant 0 : i32
    %c0_i32_0 = arith.constant 0 : i32
    %c0_i32_1 = arith.constant 0 : i32
    return %c0_i32, %c0_i32_0 : i32, i32
  }
  func.func @transform_8(%arg0: i32) -> (i32, i32) {
    %c0_i32 = arith.constant 0 : i32
    %c0_i32_0 = arith.constant 0 : i32
    %c0_i32_1 = arith.constant 0 : i32
    return %c0_i32, %c0_i32_0 : i32, i32
  }
  func.func @transform_9(%arg0: i32) -> (i32, i32) {
    %c0_i32 = arith.constant 0 : i32
    %c0_i32_0 = arith.constant 0 : i32
    return %arg0, %c0_i32 : i32, i32
  }
}

</mosaic_0001>

<llo_original>
// kernel: forward.1
$region0: #{forward.1}
  #allocation0 [shape = 'u32[]', space=smem, size = 0x4, offset = 0x4, fixed_abs, tag = 'smem constant byte address 0x4 - core index']
  #allocation1 [shape = 'u32[144,128]{1,0:T(1,128)}', space=vmem, size = 0x12000, scoped, tag = 'internal scratch']
  #allocation2 [shape = 'f32[12,160]{1,0:T(8,128)}', space=vmem, size = 0x4000, scoped, tag = 'scratch operand']
  %s0 = inlined_call_operand.vmem [shape: bf16[5,12,256], index: 0, kind: input, shape index: {}]
  %s1 = inlined_call_operand.vmem [shape: bf16[256,32], index: 1, kind: input, shape index: {}]
  %s2 = inlined_call_operand.vmem [shape: f32[1,32], index: 2, kind: input, shape index: {}]
  %s3 = inlined_call_operand.vmem [shape: bf16[3,96,64], index: 3, kind: input, shape index: {}]
  %s4 = inlined_call_operand.vmem [shape: f32[1,64], index: 4, kind: input, shape index: {}]
  %s5 = inlined_call_operand.vmem [shape: bf16[256,512], index: 5, kind: input, shape index: {}]
  %s6 = inlined_call_operand.vmem [shape: f32[1,512], index: 6, kind: input, shape index: {}]
  %s7 = inlined_call_operand.vmem [shape: bf16[512,128], index: 7, kind: input, shape index: {}]
  %s8 = inlined_call_operand.vmem [shape: f32[1,128], index: 8, kind: input, shape index: {}]
  %s9 = inlined_call_operand.hbm [shape: f32[2,128], index: 9, kind: output, shape index: {}]
  %s10 = sld [smem:[#allocation0]]
  $region46: #{forward.1} parent=0
    _
  %s12 = ssub.s32 1, %s10
  %s13 = scalar_select 0, %s12, %s10
  $region1: #{forward.1} parent=0
    #allocation3 [shape = 'u8[1024]{0}', space=vmem, size = 0x400, scoped, tag = 'output window, operand 0, single buffered']
    #allocation4 [shape = 's32[1]{0}', space=sflag, size = 0x4, scoped, tag = 'scoped memory for forward.1']
    %14 = vsyncpa [#allocation4], 0
    // Predicated region
    $region2: #{forward.1} parent=1 // pred_check
      _
    $region3: #{forward.1} parent=1 // pred_check_branch
      %16 = sbr.rel (0) target = $region5
    $region4: #{forward.1} parent=1 // pred_region
      _
    $region5: #{forward.1} parent=1 // pred_fallthru
      _
    // Predicated region
    $region6: #{forward.1} parent=1 // pred_check
      _
    $region7: #{forward.1} parent=1 // pred_check_branch
      %18 = sbr.rel (0) target = $region9
    $region8: #{forward.1} parent=1 // pred_region
      _
    $region9: #{forward.1} parent=1 // pred_fallthru
      _
    // Predicated region
    $region10: #{forward.1} parent=1 // pred_check
      _
    $region11: #{forward.1} parent=1 // pred_check_branch
      %20 = sbr.rel (0) target = $region13
    $region12: #{forward.1} parent=1 // pred_region
      _
    $region13: #{forward.1} parent=1 // pred_fallthru
      _
    // Predicated region
    $region14: #{forward.1} parent=1 // pred_check
      _
    $region15: #{forward.1} parent=1 // pred_check_branch
      %22 = sbr.rel (0) target = $region17
    $region16: #{forward.1} parent=1 // pred_region
      _
    $region17: #{forward.1} parent=1 // pred_fallthru
      _
    // Predicated region
    $region18: #{forward.1} parent=1 // pred_check
      _
    $region19: #{forward.1} parent=1 // pred_check_branch
      %24 = sbr.rel (0) target = $region21
    $region20: #{forward.1} parent=1 // pred_region
      _
    $region21: #{forward.1} parent=1 // pred_fallthru
      _
    // Predicated region
    $region22: #{forward.1} parent=1 // pred_check
      _
    $region23: #{forward.1} parent=1 // pred_check_branch
      %26 = sbr.rel (0) target = $region25
    $region24: #{forward.1} parent=1 // pred_region
      _
    $region25: #{forward.1} parent=1 // pred_fallthru
      _
    // Predicated region
    $region26: #{forward.1} parent=1 // pred_check
      _
    $region27: #{forward.1} parent=1 // pred_check_branch
      %28 = sbr.rel (0) target = $region29
    $region28: #{forward.1} parent=1 // pred_region
      _
    $region29: #{forward.1} parent=1 // pred_fallthru
      _
    // Predicated region
    $region30: #{forward.1} parent=1 // pred_check
      _
    $region31: #{forward.1} parent=1 // pred_check_branch
      %30 = sbr.rel (0) target = $region33
    $region32: #{forward.1} parent=1 // pred_region
      _
    $region33: #{forward.1} parent=1 // pred_fallthru
      _
    // Predicated region
    $region34: #{forward.1} parent=1 // pred_check
      _
    $region35: #{forward.1} parent=1 // pred_check_branch
      %32 = sbr.rel (0) target = $region37
    $region36: #{forward.1} parent=1 // pred_region
      _
    $region37: #{forward.1} parent=1 // pred_fallthru
      _
    %v34 = vld [vmem:[%s1] sm:$0xf]
    %v35 = vld [vmem:[%s1 + $0x4] sm:$0xf]
    %v36 = vld [vmem:[%s1 + $0x8] sm:$0xf]
    %v37 = vld [vmem:[%s1 + $0xc] sm:$0xf]
    %v38 = vld [vmem:[%s1 + $0x10] sm:$0xf]
    %v39 = vld [vmem:[%s1 + $0x14] sm:$0xf]
    %v40 = vld [vmem:[%s1 + $0x18] sm:$0xf]
    %v41 = vld [vmem:[%s1 + $0x1c] sm:$0xf]
    %v42 = vld [vmem:[%s1 + $0x20] sm:$0xf]
    %v43 = vld [vmem:[%s1 + $0x24] sm:$0xf]
    %v44 = vld [vmem:[%s1 + $0x28] sm:$0xf]
    %v45 = vld [vmem:[%s1 + $0x2c] sm:$0xf]
    %v46 = vld [vmem:[%s1 + $0x30] sm:$0xf]
    %v47 = vld [vmem:[%s1 + $0x34] sm:$0xf]
    %v48 = vld [vmem:[%s1 + $0x38] sm:$0xf]
    %v49 = vld [vmem:[%s1 + $0x3c] sm:$0xf]
    %v50 = vld [vmem:[%s1 + $0x40] sm:$0xf]
    %v51 = vld [vmem:[%s1 + $0x44] sm:$0xf]
    %v52 = vld [vmem:[%s1 + $0x48] sm:$0xf]
    %v53 = vld [vmem:[%s1 + $0x4c] sm:$0xf]
    %v54 = vld [vmem:[%s1 + $0x50] sm:$0xf]
    %v55 = vld [vmem:[%s1 + $0x54] sm:$0xf]
    %v56 = vld [vmem:[%s1 + $0x58] sm:$0xf]
    %v57 = vld [vmem:[%s1 + $0x5c] sm:$0xf]
    %v58 = vld [vmem:[%s1 + $0x60] sm:$0xf]
    %v59 = vld [vmem:[%s1 + $0x64] sm:$0xf]
    %v60 = vld [vmem:[%s1 + $0x68] sm:$0xf]
    %v61 = vld [vmem:[%s1 + $0x6c] sm:$0xf]
    %v62 = vld [vmem:[%s1 + $0x70] sm:$0xf]
    %v63 = vld [vmem:[%s1 + $0x74] sm:$0xf]
    %v64 = vld [vmem:[%s1 + $0x78] sm:$0xf]
    %v65 = vld [vmem:[%s1 + $0x7c] sm:$0xf]
    %v66 = vld [vmem:[%s2] sm:$0x1]
    %v67 = vld [vmem:[%s0] sm:$0xff]
    %v68 = vld [vmem:[%s0 + $0x8] sm:$0x33]
    %v70 = vlaneseq
    %v71 = vshrl.u32 %v70, 7
    %v72 = vsub.s32 0, %v71
    %v73 = vrot.slane %v66, %v72
    %v77 = vunpack.c.l.b16 %v67
    %v78 = vunpack.c.h.b16 %v67
    %v79 = vunpack.c.l.b16 %v68
    %v80 = vunpack.c.h.b16 %v68
    %v81 = vpack.c.b16 %v79, %v77
    %v82 = vpack.c.b16 %v80, %v78
    %v117 = vunpack.c.l.b16 %v34
    %v118 = vunpack.c.l.b16 %v35
    %v119 = vunpack.c.l.b16 %v36
    %v120 = vunpack.c.l.b16 %v37
    %v121 = vunpack.c.l.b16 %v38
    %v122 = vunpack.c.l.b16 %v39
    %v123 = vunpack.c.l.b16 %v40
    %v124 = vunpack.c.l.b16 %v41
    %v125 = vunpack.c.l.b16 %v42
    %v126 = vunpack.c.l.b16 %v43
    %v127 = vunpack.c.l.b16 %v44
    %v128 = vunpack.c.l.b16 %v45
    %v129 = vunpack.c.l.b16 %v46
    %v130 = vunpack.c.l.b16 %v47
    %v131 = vunpack.c.l.b16 %v48
    %v132 = vunpack.c.l.b16 %v49
    %v133 = vunpack.c.l.b16 %v50
    %v134 = vunpack.c.l.b16 %v51
    %v135 = vunpack.c.l.b16 %v52
    %v136 = vunpack.c.l.b16 %v53
    %v137 = vunpack.c.l.b16 %v54
    %v138 = vunpack.c.l.b16 %v55
    %v139 = vunpack.c.l.b16 %v56
    %v140 = vunpack.c.l.b16 %v57
    %v141 = vunpack.c.l.b16 %v58
    %v142 = vunpack.c.l.b16 %v59
    %v143 = vunpack.c.l.b16 %v60
    %v144 = vunpack.c.l.b16 %v61
    %v145 = vunpack.c.l.b16 %v62
    %v146 = vunpack.c.l.b16 %v63
    %v147 = vunpack.c.l.b16 %v64
    %v148 = vunpack.c.l.b16 %v65
    %v149 = vpack.c.b16 %v118, %v117
    %v150 = vpack.c.b16 %v120, %v119
    %v151 = vpack.c.b16 %v122, %v121
    %v152 = vpack.c.b16 %v124, %v123
    %v153 = vpack.c.b16 %v126, %v125
    %v154 = vpack.c.b16 %v128, %v127
    %v155 = vpack.c.b16 %v130, %v129
    %v156 = vpack.c.b16 %v132, %v131
    %v157 = vpack.c.b16 %v134, %v133
    %v158 = vpack.c.b16 %v136, %v135
    %v159 = vpack.c.b16 %v138, %v137
    %v160 = vpack.c.b16 %v140, %v139
    %v161 = vpack.c.b16 %v142, %v141
    %v162 = vpack.c.b16 %v144, %v143
    %v163 = vpack.c.b16 %v146, %v145
    %v164 = vpack.c.b16 %v148, %v147
    %181 = vmatprep.subr.bf16.mxu0 0
    %182 = vmatpush1.bf16.msra.mxu0 %v149
    %183 = vmatprep.subr.bf16.mxu0 0
    %184 = vmatpush1.bf16.msra.mxu0 %v150
    %185 = vmatprep.subr.bf16.mxu0 0
    %186 = vmatpush1.bf16.msra.mxu0 %v151
    %187 = vmatprep.subr.bf16.mxu0 0
    %188 = vmatpush1.bf16.msra.mxu0 %v152
    %189 = vmatprep.subr.bf16.mxu0 0
    %190 = vmatpush1.bf16.msra.mxu0 %v153
    %191 = vmatprep.subr.bf16.mxu0 0
    %192 = vmatpush1.bf16.msra.mxu0 %v154
    %193 = vmatprep.subr.bf16.mxu0 0
    %194 = vmatpush1.bf16.msra.mxu0 %v155
    %195 = vmatprep.subr.bf16.mxu0 0
    %196 = vmatpush1.bf16.msra.mxu0 %v156
    %197 = vmatprep.subr.bf16.mxu0 0
    %198 = vmatpush1.bf16.msra.mxu0 %v157
    %199 = vmatprep.subr.bf16.mxu0 0
    %200 = vmatpush1.bf16.msra.mxu0 %v158
    %201 = vmatprep.subr.bf16.mxu0 0
    %202 = vmatpush1.bf16.msra.mxu0 %v159
    %203 = vmatprep.subr.bf16.mxu0 0
    %204 = vmatpush1.bf16.msra.mxu0 %v160
    %205 = vmatprep.subr.bf16.mxu0 0
    %206 = vmatpush1.bf16.msra.mxu0 %v161
    %207 = vmatprep.subr.bf16.mxu0 0
    %208 = vmatpush1.bf16.msra.mxu0 %v162
    %209 = vmatprep.subr.bf16.mxu0 0
    %210 = vmatpush1.bf16.msra.mxu0 %v163
    %211 = vmatprep.subr.bf16.mxu0 0
    %212 = vmatpush1.bf16.msra.mxu0 %v164
    %213 = vmatprep.mubr.bf16.mxu0 %v82
    %214 = vmatmul.mubr.bf16.gmra.mrb[0].mxu0 %v81
    %v215 = vpop.f32.mrb[0].mxu0
    %v216 = vadd.f32 %v73, %v215
    %v217 = vpop.f32.mrb[0].mxu0
    %v218 = vpop.f32.mrb[0].mxu0
    %v219 = vadd.f32 %v73, %v218
    %v220 = vpop.f32.mrb[0].mxu0
    %221 = vdwg.mxu0
    %v222 = vmax.f32 %v216, 0.0
    %v223 = vmax.f32 %v219, 0.0
    %vm224 = vcmask 261120
    %225 = vst.msk [vmem:[#allocation2] sm:$0xff] %vm224, %v222
    %vm226 = vcmask 257024
    %227 = vst.msk [vmem:[#allocation2 + $0x10] sm:$0xf] %vm226, %v223
    %s228 = scalar_lea.vmem %s0, 16
    %v229 = vld [vmem:[%s228] sm:$0xff]
    %v230 = vld [vmem:[%s228 + $0x8] sm:$0x33]
    %v233 = vunpack.c.l.b16 %v229
    %v234 = vunpack.c.h.b16 %v229
    %v235 = vunpack.c.l.b16 %v230
    %v236 = vunpack.c.h.b16 %v230
    %v237 = vpack.c.b16 %v235, %v233
    %v238 = vpack.c.b16 %v236, %v234
    %241 = vmatprep.subr.bf16.mxu0 0
    %242 = vmatpush1.bf16.msra.mxu0 %v149
    %243 = vmatprep.subr.bf16.mxu0 0
    %244 = vmatpush1.bf16.msra.mxu0 %v150
    %245 = vmatprep.subr.bf16.mxu0 0
    %246 = vmatpush1.bf16.msra.mxu0 %v151
    %247 = vmatprep.subr.bf16.mxu0 0
    %248 = vmatpush1.bf16.msra.mxu0 %v152
    %249 = vmatprep.subr.bf16.mxu0 0
    %250 = vmatpush1.bf16.msra.mxu0 %v153
    %251 = vmatprep.subr.bf16.mxu0 0
    %252 = vmatpush1.bf16.msra.mxu0 %v154
    %253 = vmatprep.subr.bf16.mxu0 0
    %254 = vmatpush1.bf16.msra.mxu0 %v155
    %255 = vmatprep.subr.bf16.mxu0 0
    %256 = vmatpush1.bf16.msra.mxu0 %v156
    %257 = vmatprep.subr.bf16.mxu0 0
    %258 = vmatpush1.bf16.msra.mxu0 %v157
    %259 = vmatprep.subr.bf16.mxu0 0
    %260 = vmatpush1.bf16.msra.mxu0 %v158
    %261 = vmatprep.subr.bf16.mxu0 0
    %262 = vmatpush1.bf16.msra.mxu0 %v159
    %263 = vmatprep.subr.bf16.mxu0 0
    %264 = vmatpush1.bf16.msra.mxu0 %v160
    %265 = vmatprep.subr.bf16.mxu0 0
    %266 = vmatpush1.bf16.msra.mxu0 %v161
    %267 = vmatprep.subr.bf16.mxu0 0
    %268 = vmatpush1.bf16.msra.mxu0 %v162
    %269 = vmatprep.subr.bf16.mxu0 0
    %270 = vmatpush1.bf16.msra.mxu0 %v163
    %271 = vmatprep.subr.bf16.mxu0 0
    %272 = vmatpush1.bf16.msra.mxu0 %v164
    %273 = vmatprep.mubr.bf16.mxu0 %v238
    %274 = vmatmul.mubr.bf16.gmra.mrb[0].mxu0 %v237
    %v275 = vpop.f32.mrb[0].mxu0
    %v276 = vadd.f32 %v73, %v275
    %v277 = vpop.f32.mrb[0].mxu0
    %v278 = vpop.f32.mrb[0].mxu0
    %v279 = vadd.f32 %v73, %v278
    %v280 = vpop.f32.mrb[0].mxu0
    %281 = vdwg.mxu0
    %v282 = vmax.f32 %v276, 0.0
    %v283 = vmax.f32 %v279, 0.0
    %286 = vrot.lane.b32.xlu0 %v282, 32
    %v287 = vpop.permute.xlu0 %286
    %288 = vrot.lane.b32.xlu0 %v283, 32
    %v289 = vpop.permute.xlu0 %288
    %vm292 = vcmask 523520
    %293 = vst.msk [vmem:[#allocation2] sm:$0xff] %vm292, %v287
    %vm294 = vcmask 519424
    %295 = vst.msk [vmem:[#allocation2 + $0x10] sm:$0xf] %vm294, %v289
    %s296 = scalar_lea.vmem %s0, 32
    %v297 = vld [vmem:[%s296] sm:$0xff]
    %v298 = vld [vmem:[%s296 + $0x8] sm:$0x33]
    %v301 = vunpack.c.l.b16 %v297
    %v302 = vunpack.c.h.b16 %v297
    %v303 = vunpack.c.l.b16 %v298
    %v304 = vunpack.c.h.b16 %v298
    %v305 = vpack.c.b16 %v303, %v301
    %v306 = vpack.c.b16 %v304, %v302
    %309 = vmatprep.subr.bf16.mxu0 0
    %310 = vmatpush1.bf16.msra.mxu0 %v149
    %311 = vmatprep.subr.bf16.mxu0 0
    %312 = vmatpush1.bf16.msra.mxu0 %v150
    %313 = vmatprep.subr.bf16.mxu0 0
    %314 = vmatpush1.bf16.msra.mxu0 %v151
    %315 = vmatprep.subr.bf16.mxu0 0
    %316 = vmatpush1.bf16.msra.mxu0 %v152
    %317 = vmatprep.subr.bf16.mxu0 0
    %318 = vmatpush1.bf16.msra.mxu0 %v153
    %319 = vmatprep.subr.bf16.mxu0 0
    %320 = vmatpush1.bf16.msra.mxu0 %v154
    %321 = vmatprep.subr.bf16.mxu0 0
    %322 = vmatpush1.bf16.msra.mxu0 %v155
    %323 = vmatprep.subr.bf16.mxu0 0
    %324 = vmatpush1.bf16.msra.mxu0 %v156
    %325 = vmatprep.subr.bf16.mxu0 0
    %326 = vmatpush1.bf16.msra.mxu0 %v157
    %327 = vmatprep.subr.bf16.mxu0 0
    %328 = vmatpush1.bf16.msra.mxu0 %v158
    %329 = vmatprep.subr.bf16.mxu0 0
    %330 = vmatpush1.bf16.msra.mxu0 %v159
    %331 = vmatprep.subr.bf16.mxu0 0
    %332 = vmatpush1.bf16.msra.mxu0 %v160
    %333 = vmatprep.subr.bf16.mxu0 0
    %334 = vmatpush1.bf16.msra.mxu0 %v161
    %335 = vmatprep.subr.bf16.mxu0 0
    %336 = vmatpush1.bf16.msra.mxu0 %v162
    %337 = vmatprep.subr.bf16.mxu0 0
    %338 = vmatpush1.bf16.msra.mxu0 %v163
    %339 = vmatprep.subr.bf16.mxu0 0
    %340 = vmatpush1.bf16.msra.mxu0 %v164
    %341 = vmatprep.mubr.bf16.mxu0 %v306
    %342 = vmatmul.mubr.bf16.gmra.mrb[0].mxu0 %v305
    %v343 = vpop.f32.mrb[0].mxu0
    %v344 = vadd.f32 %v73, %v343
    %v345 = vpop.f32.mrb[0].mxu0
    %v346 = vpop.f32.mrb[0].mxu0
    %v347 = vadd.f32 %v73, %v346
    %v348 = vpop.f32.mrb[0].mxu0
    %349 = vdwg.mxu0
    %v350 = vmax.f32 %v344, 0.0
    %v351 = vmax.f32 %v347, 0.0
    %354 = vrot.lane.b32.xlu0 %v350, 64
    %v355 = vpop.permute.xlu0 %354
    %356 = vrot.lane.b32.xlu0 %v351, 64
    %v357 = vpop.permute.xlu0 %356
    %vm360 = vcmask 785920
    %361 = vst.msk [vmem:[#allocation2] sm:$0xff] %vm360, %v355
    %vm362 = vcmask 781824
    %363 = vst.msk [vmem:[#allocation2 + $0x10] sm:$0xf] %vm362, %v357
    %s364 = scalar_lea.vmem %s0, 48
    %v365 = vld [vmem:[%s364] sm:$0xff]
    %v366 = vld [vmem:[%s364 + $0x8] sm:$0x33]
    %v369 = vunpack.c.l.b16 %v365
    %v370 = vunpack.c.h.b16 %v365
    %v371 = vunpack.c.l.b16 %v366
    %v372 = vunpack.c.h.b16 %v366
    %v373 = vpack.c.b16 %v371, %v369
    %v374 = vpack.c.b16 %v372, %v370
    %377 = vmatprep.subr.bf16.mxu0 0
    %378 = vmatpush1.bf16.msra.mxu0 %v149
    %379 = vmatprep.subr.bf16.mxu0 0
    %380 = vmatpush1.bf16.msra.mxu0 %v150
    %381 = vmatprep.subr.bf16.mxu0 0
    %382 = vmatpush1.bf16.msra.mxu0 %v151
    %383 = vmatprep.subr.bf16.mxu0 0
    %384 = vmatpush1.bf16.msra.mxu0 %v152
    %385 = vmatprep.subr.bf16.mxu0 0
    %386 = vmatpush1.bf16.msra.mxu0 %v153
    %387 = vmatprep.subr.bf16.mxu0 0
    %388 = vmatpush1.bf16.msra.mxu0 %v154
    %389 = vmatprep.subr.bf16.mxu0 0
    %390 = vmatpush1.bf16.msra.mxu0 %v155
    %391 = vmatprep.subr.bf16.mxu0 0
    %392 = vmatpush1.bf16.msra.mxu0 %v156
    %393 = vmatprep.subr.bf16.mxu0 0
    %394 = vmatpush1.bf16.msra.mxu0 %v157
    %395 = vmatprep.subr.bf16.mxu0 0
    %396 = vmatpush1.bf16.msra.mxu0 %v158
    %397 = vmatprep.subr.bf16.mxu0 0
    %398 = vmatpush1.bf16.msra.mxu0 %v159
    %399 = vmatprep.subr.bf16.mxu0 0
    %400 = vmatpush1.bf16.msra.mxu0 %v160
    %401 = vmatprep.subr.bf16.mxu0 0
    %402 = vmatpush1.bf16.msra.mxu0 %v161
    %403 = vmatprep.subr.bf16.mxu0 0
    %404 = vmatpush1.bf16.msra.mxu0 %v162
    %405 = vmatprep.subr.bf16.mxu0 0
    %406 = vmatpush1.bf16.msra.mxu0 %v163
    %407 = vmatprep.subr.bf16.mxu0 0
    %408 = vmatpush1.bf16.msra.mxu0 %v164
    %409 = vmatprep.mubr.bf16.mxu0 %v374
    %410 = vmatmul.mubr.bf16.gmra.mrb[0].mxu0 %v373
    %v411 = vpop.f32.mrb[0].mxu0
    %v412 = vadd.f32 %v73, %v411
    %v413 = vpop.f32.mrb[0].mxu0
    %v414 = vpop.f32.mrb[0].mxu0
    %v415 = vadd.f32 %v73, %v414
    %v416 = vpop.f32.mrb[0].mxu0
    %417 = vdwg.mxu0
    %v418 = vmax.f32 %v412, 0.0
    %v419 = vmax.f32 %v415, 0.0
    %422 = vrot.lane.b32.xlu0 %v418, 96
    %v423 = vpop.permute.xlu0 %422
    %424 = vrot.lane.b32.xlu0 %v419, 96
    %v425 = vpop.permute.xlu0 %424
    %vm428 = vcmask 1048320
    %429 = vst.msk [vmem:[#allocation2] sm:$0xff] %vm428, %v423
    %vm430 = vcmask 1044224
    %431 = vst.msk [vmem:[#allocation2 + $0x10] sm:$0xf] %vm430, %v425
    %s432 = scalar_lea.vmem %s0, 64
    %v433 = vld [vmem:[%s432] sm:$0xff]
    %v434 = vld [vmem:[%s432 + $0x8] sm:$0x33]
    %v437 = vunpack.c.l.b16 %v433
    %v438 = vunpack.c.h.b16 %v433
    %v439 = vunpack.c.l.b16 %v434
    %v440 = vunpack.c.h.b16 %v434
    %v441 = vpack.c.b16 %v439, %v437
    %v442 = vpack.c.b16 %v440, %v438
    %445 = vmatprep.subr.bf16.mxu0 0
    %446 = vmatpush1.bf16.msra.mxu0 %v149
    %447 = vmatprep.subr.bf16.mxu0 0
    %448 = vmatpush1.bf16.msra.mxu0 %v150
    %449 = vmatprep.subr.bf16.mxu0 0
    %450 = vmatpush1.bf16.msra.mxu0 %v151
    %451 = vmatprep.subr.bf16.mxu0 0
    %452 = vmatpush1.bf16.msra.mxu0 %v152
    %453 = vmatprep.subr.bf16.mxu0 0
    %454 = vmatpush1.bf16.msra.mxu0 %v153
    %455 = vmatprep.subr.bf16.mxu0 0
    %456 = vmatpush1.bf16.msra.mxu0 %v154
    %457 = vmatprep.subr.bf16.mxu0 0
    %458 = vmatpush1.bf16.msra.mxu0 %v155
    %459 = vmatprep.subr.bf16.mxu0 0
    %460 = vmatpush1.bf16.msra.mxu0 %v156
    %461 = vmatprep.subr.bf16.mxu0 0
    %462 = vmatpush1.bf16.msra.mxu0 %v157
    %463 = vmatprep.subr.bf16.mxu0 0
    %464 = vmatpush1.bf16.msra.mxu0 %v158
    %465 = vmatprep.subr.bf16.mxu0 0
    %466 = vmatpush1.bf16.msra.mxu0 %v159
    %467 = vmatprep.subr.bf16.mxu0 0
    %468 = vmatpush1.bf16.msra.mxu0 %v160
    %469 = vmatprep.subr.bf16.mxu0 0
    %470 = vmatpush1.bf16.msra.mxu0 %v161
    %471 = vmatprep.subr.bf16.mxu0 0
    %472 = vmatpush1.bf16.msra.mxu0 %v162
    %473 = vmatprep.subr.bf16.mxu0 0
    %474 = vmatpush1.bf16.msra.mxu0 %v163
    %475 = vmatprep.subr.bf16.mxu0 0
    %476 = vmatpush1.bf16.msra.mxu0 %v164
    %477 = vmatprep.mubr.bf16.mxu0 %v442
    %478 = vmatmul.mubr.bf16.gmra.mrb[0].mxu0 %v441
    %v479 = vpop.f32.mrb[0].mxu0
    %v480 = vadd.f32 %v73, %v479
    %v481 = vpop.f32.mrb[0].mxu0
    %v482 = vpop.f32.mrb[0].mxu0
    %v483 = vadd.f32 %v73, %v482
    %v484 = vpop.f32.mrb[0].mxu0
    %485 = vdwg.mxu0
    %v486 = vmax.f32 %v480, 0.0
    %v487 = vmax.f32 %v483, 0.0
    %488 = vst.msk [vmem:[#allocation2 + $0x8] sm:$0xff] %vm224, %v486
    %489 = vst.msk [vmem:[#allocation2 + $0x18] sm:$0xf] %vm226, %v487
    %v490 = vld [vmem:[%s4] sm:$0x1]
    %v491 = vld [vmem:[#allocation2] sm:$0x3]
    %v492 = vld [vmem:[#allocation2 + $0x8] sm:$0x3]
    %v493 = vpack.c.bf16 %v491, %v491
    %v494 = vpack.c.bf16 %v492, %v492
    %v495 = vld [vmem:[%s3] sm:$0xf]
    %v496 = vld [vmem:[%s3 + $0x4] sm:$0xf]
    %v497 = vld [vmem:[%s3 + $0x8] sm:$0xf]
    %v498 = vld [vmem:[%s3 + $0xc] sm:$0xf]
    %v499 = vld [vmem:[%s3 + $0x10] sm:$0xf]
    %v500 = vld [vmem:[%s3 + $0x14] sm:$0xf]
    %v501 = vld [vmem:[%s3 + $0x18] sm:$0xf]
    %v502 = vld [vmem:[%s3 + $0x1c] sm:$0xf]
    %v503 = vld [vmem:[%s3 + $0x20] sm:$0xf]
    %v504 = vld [vmem:[%s3 + $0x24] sm:$0xf]
    %v505 = vld [vmem:[%s3 + $0x28] sm:$0xf]
    %v506 = vld [vmem:[%s3 + $0x2c] sm:$0xf]
    %v507 = vld [vmem:[#allocation2] sm:$0xc]
    %v508 = vld [vmem:[#allocation2 + $0x8] sm:$0xc]
    %v509 = vpack.c.bf16 %v507, %v507
    %v510 = vpack.c.bf16 %v508, %v508
    %s511 = scalar_lea.vmem %s3, 48
    %v512 = vld [vmem:[%s511] sm:$0xf]
    %v513 = vld [vmem:[%s511 + $0x4] sm:$0xf]
    %v514 = vld [vmem:[%s511 + $0x8] sm:$0xf]
    %v515 = vld [vmem:[%s511 + $0xc] sm:$0xf]
    %v516 = vld [vmem:[%s511 + $0x10] sm:$0xf]
    %v517 = vld [vmem:[%s511 + $0x14] sm:$0xf]
    %v518 = vld [vmem:[%s511 + $0x18] sm:$0xf]
    %v519 = vld [vmem:[%s511 + $0x1c] sm:$0xf]
    %v520 = vld [vmem:[%s511 + $0x20] sm:$0xf]
    %v521 = vld [vmem:[%s511 + $0x24] sm:$0xf]
    %v522 = vld [vmem:[%s511 + $0x28] sm:$0xf]
    %v523 = vld [vmem:[%s511 + $0x2c] sm:$0xf]
    %v525 = vrot.slane %v509, 1
    %v538 = vunpack.c.l.b16 %v512
    %v539 = vunpack.c.l.b16 %v513
    %v540 = vunpack.c.l.b16 %v514
    %v541 = vunpack.c.l.b16 %v515
    %v542 = vunpack.c.l.b16 %v516
    %v543 = vunpack.c.l.b16 %v517
    %v544 = vunpack.c.l.b16 %v518
    %v545 = vunpack.c.l.b16 %v519
    %v546 = vunpack.c.l.b16 %v520
    %v547 = vunpack.c.l.b16 %v521
    %v548 = vunpack.c.l.b16 %v522
    %v549 = vunpack.c.l.b16 %v523
    %v550 = vpack.c.b16 %v539, %v538
    %v551 = vpack.c.b16 %v541, %v540
    %v552 = vpack.c.b16 %v543, %v542
    %v553 = vpack.c.b16 %v545, %v544
    %v554 = vpack.c.b16 %v547, %v546
    %v555 = vpack.c.b16 %v549, %v548
    %vm562 = vcmask 785408
    %v564 = vsel %vm562, %v525, 0
    %566 = vmatprep.subr.bf16.mxu0 0
    %567 = vmatpush1.bf16.msra.mxu0 %v550
    %568 = vmatprep.subr.bf16.mxu0 0
    %569 = vmatpush1.bf16.msra.mxu0 %v551
    %570 = vmatprep.subr.bf16.mxu0 0
    %571 = vmatpush1.bf16.msra.mxu0 %v552
    %572 = vmatprep.subr.bf16.mxu0 0
    %573 = vmatpush1.bf16.msra.mxu0 %v553
    %574 = vmatprep.subr.bf16.mxu0 0
    %575 = vmatpush1.bf16.msra.mxu0 %v554
    %576 = vmatprep.subr.bf16.mxu0 0
    %577 = vmatpush1.bf16.msra.mxu0 %v555
    %578 = vmatprep.subr.bf16.mxu0 0
    %579 = vmatpush1.bf16.msra.mxu0 0
    %580 = vmatprep.subr.bf16.mxu0 0
    %581 = vmatpush1.bf16.msra.mxu0 0
    %582 = vmatprep.subr.bf16.mxu0 0
    %583 = vmatpush1.bf16.msra.mxu0 0
    %584 = vmatprep.subr.bf16.mxu0 0
    %585 = vmatpush1.bf16.msra.mxu0 0
    %586 = vmatprep.subr.bf16.mxu0 0
    %587 = vmatpush1.bf16.msra.mxu0 0
    %588 = vmatprep.subr.bf16.mxu0 0
    %589 = vmatpush1.bf16.msra.mxu0 0
    %590 = vmatprep.subr.bf16.mxu0 0
    %591 = vmatpush1.bf16.msra.mxu0 0
    %592 = vmatprep.subr.bf16.mxu0 0
    %593 = vmatpush1.bf16.msra.mxu0 0
    %594 = vmatprep.subr.bf16.mxu0 0
    %595 = vmatpush1.bf16.msra.mxu0 0
    %596 = vmatprep.subr.bf16.mxu0 0
    %597 = vmatpush1.bf16.msra.mxu0 0
    %598 = vmatprep.mubr.bf16.mxu0 0
    %599 = vmatmul.mubr.bf16.gmra.mrb[0].mxu0 %v564
    %v600 = vpop.f32.mrb[0].mxu0
    %v601 = vadd.f32 0.0, %v600
    %v602 = vpop.f32.mrb[0].mxu0
    %v603 = vpop.f32.mrb[0].mxu0
    %v604 = vpop.f32.mrb[0].mxu0
    %605 = vdwg.mxu0
    %v618 = vunpack.c.l.b16 %v495
    %v619 = vunpack.c.l.b16 %v496
    %v620 = vunpack.c.l.b16 %v497
    %v621 = vunpack.c.l.b16 %v498
    %v622 = vunpack.c.l.b16 %v499
    %v623 = vunpack.c.l.b16 %v500
    %v624 = vunpack.c.l.b16 %v501
    %v625 = vunpack.c.l.b16 %v502
    %v626 = vunpack.c.l.b16 %v503
    %v627 = vunpack.c.l.b16 %v504
    %v628 = vunpack.c.l.b16 %v505
    %v629 = vunpack.c.l.b16 %v506
    %v630 = vpack.c.b16 %v619, %v618
    %v631 = vpack.c.b16 %v621, %v620
    %v632 = vpack.c.b16 %v623, %v622
    %v633 = vpack.c.b16 %v625, %v624
    %v634 = vpack.c.b16 %v627, %v626
    %v635 = vpack.c.b16 %v629, %v628
    %v643 = vsel %vm562, %v493, 0
    %645 = vmatprep.subr.bf16.mxu0 0
    %646 = vmatpush1.bf16.msra.mxu0 %v630
    %647 = vmatprep.subr.bf16.mxu0 0
    %648 = vmatpush1.bf16.msra.mxu0 %v631
    %649 = vmatprep.subr.bf16.mxu0 0
    %650 = vmatpush1.bf16.msra.mxu0 %v632
    %651 = vmatprep.subr.bf16.mxu0 0
    %652 = vmatpush1.bf16.msra.mxu0 %v633
    %653 = vmatprep.subr.bf16.mxu0 0
    %654 = vmatpush1.bf16.msra.mxu0 %v634
    %655 = vmatprep.subr.bf16.mxu0 0
    %656 = vmatpush1.bf16.msra.mxu0 %v635
    %657 = vmatprep.subr.bf16.mxu0 0
    %658 = vmatpush1.bf16.msra.mxu0 0
    %659 = vmatprep.subr.bf16.mxu0 0
    %660 = vmatpush1.bf16.msra.mxu0 0
    %661 = vmatprep.subr.bf16.mxu0 0
    %662 = vmatpush1.bf16.msra.mxu0 0
    %663 = vmatprep.subr.bf16.mxu0 0
    %664 = vmatpush1.bf16.msra.mxu0 0
    %665 = vmatprep.subr.bf16.mxu0 0
    %666 = vmatpush1.bf16.msra.mxu0 0
    %667 = vmatprep.subr.bf16.mxu0 0
    %668 = vmatpush1.bf16.msra.mxu0 0
    %669 = vmatprep.subr.bf16.mxu0 0
    %670 = vmatpush1.bf16.msra.mxu0 0
    %671 = vmatprep.subr.bf16.mxu0 0
    %672 = vmatpush1.bf16.msra.mxu0 0
    %673 = vmatprep.subr.bf16.mxu0 0
    %674 = vmatpush1.bf16.msra.mxu0 0
    %675 = vmatprep.subr.bf16.mxu0 0
    %676 = vmatpush1.bf16.msra.mxu0 0
    %677 = vmatprep.mubr.bf16.mxu0 0
    %678 = vmatmul.mubr.bf16.gmra.mrb[0].mxu0 %v643
    %v679 = vpop.f32.mrb[0].mxu0
    %v680 = vadd.f32 %v601, %v679
    %v681 = vpop.f32.mrb[0].mxu0
    %v682 = vpop.f32.mrb[0].mxu0
    %v683 = vpop.f32.mrb[0].mxu0
    %684 = vdwg.mxu0
    %v686 = vrot.slane %v510, 1
    %687 = vrot.lane.b32.xlu0 %v525, 64
    %v688 = vpop.permute.xlu0 %687
    %689 = vrot.lane.b32.xlu0 %v686, 64
    %v690 = vpop.permute.xlu0 %689
    %vm691 = vcmask 523264
    %v692 = vsel %vm691, %v688, %v690
    %v694 = vsel %vm562, %v692, 0
    %696 = vmatprep.subr.bf16.mxu0 0
    %697 = vmatpush1.bf16.msra.mxu0 %v550
    %698 = vmatprep.subr.bf16.mxu0 0
    %699 = vmatpush1.bf16.msra.mxu0 %v551
    %700 = vmatprep.subr.bf16.mxu0 0
    %701 = vmatpush1.bf16.msra.mxu0 %v552
    %702 = vmatprep.subr.bf16.mxu0 0
    %703 = vmatpush1.bf16.msra.mxu0 %v553
    %704 = vmatprep.subr.bf16.mxu0 0
    %705 = vmatpush1.bf16.msra.mxu0 %v554
    %706 = vmatprep.subr.bf16.mxu0 0
    %707 = vmatpush1.bf16.msra.mxu0 %v555
    %708 = vmatprep.subr.bf16.mxu0 0
    %709 = vmatpush1.bf16.msra.mxu0 0
    %710 = vmatprep.subr.bf16.mxu0 0
    %711 = vmatpush1.bf16.msra.mxu0 0
    %712 = vmatprep.subr.bf16.mxu0 0
    %713 = vmatpush1.bf16.msra.mxu0 0
    %714 = vmatprep.subr.bf16.mxu0 0
    %715 = vmatpush1.bf16.msra.mxu0 0
    %716 = vmatprep.subr.bf16.mxu0 0
    %717 = vmatpush1.bf16.msra.mxu0 0
    %718 = vmatprep.subr.bf16.mxu0 0
    %719 = vmatpush1.bf16.msra.mxu0 0
    %720 = vmatprep.subr.bf16.mxu0 0
    %721 = vmatpush1.bf16.msra.mxu0 0
    %722 = vmatprep.subr.bf16.mxu0 0
    %723 = vmatpush1.bf16.msra.mxu0 0
    %724 = vmatprep.subr.bf16.mxu0 0
    %725 = vmatpush1.bf16.msra.mxu0 0
    %726 = vmatprep.subr.bf16.mxu0 0
    %727 = vmatpush1.bf16.msra.mxu0 0
    %728 = vmatprep.mubr.bf16.mxu0 0
    %729 = vmatmul.mubr.bf16.gmra.mrb[0].mxu0 %v694
    %v730 = vpop.f32.mrb[0].mxu0
    %v731 = vadd.f32 0.0, %v730
    %v732 = vpop.f32.mrb[0].mxu0
    %v733 = vpop.f32.mrb[0].mxu0
    %v734 = vpop.f32.mrb[0].mxu0
    %735 = vdwg.mxu0
    %738 = vrot.lane.b32.xlu0 %v493, 64
    %v739 = vpop.permute.xlu0 %738
    %740 = vrot.lane.b32.xlu0 %v494, 64
    %v741 = vpop.permute.xlu0 %740
    %v742 = vsel %vm691, %v739, %v741
    %v744 = vsel %vm562, %v742, 0
    %746 = vmatprep.subr.bf16.mxu0 0
    %747 = vmatpush1.bf16.msra.mxu0 %v630
    %748 = vmatprep.subr.bf16.mxu0 0
    %749 = vmatpush1.bf16.msra.mxu0 %v631
    %750 = vmatprep.subr.bf16.mxu0 0
    %751 = vmatpush1.bf16.msra.mxu0 %v632
    %752 = vmatprep.subr.bf16.mxu0 0
    %753 = vmatpush1.bf16.msra.mxu0 %v633
    %754 = vmatprep.subr.bf16.mxu0 0
    %755 = vmatpush1.bf16.msra.mxu0 %v634
    %756 = vmatprep.subr.bf16.mxu0 0
    %757 = vmatpush1.bf16.msra.mxu0 %v635
    %758 = vmatprep.subr.bf16.mxu0 0
    %759 = vmatpush1.bf16.msra.mxu0 0
    %760 = vmatprep.subr.bf16.mxu0 0
    %761 = vmatpush1.bf16.msra.mxu0 0
    %762 = vmatprep.subr.bf16.mxu0 0
    %763 = vmatpush1.bf16.msra.mxu0 0
    %764 = vmatprep.subr.bf16.mxu0 0
    %765 = vmatpush1.bf16.msra.mxu0 0
    %766 = vmatprep.subr.bf16.mxu0 0
    %767 = vmatpush1.bf16.msra.mxu0 0
    %768 = vmatprep.subr.bf16.mxu0 0
    %769 = vmatpush1.bf16.msra.mxu0 0
    %770 = vmatprep.subr.bf16.mxu0 0
    %771 = vmatpush1.bf16.msra.mxu0 0
    %772 = vmatprep.subr.bf16.mxu0 0
    %773 = vmatpush1.bf16.msra.mxu0 0
    %774 = vmatprep.subr.bf16.mxu0 0
    %775 = vmatpush1.bf16.msra.mxu0 0
    %776 = vmatprep.subr.bf16.mxu0 0
    %777 = vmatpush1.bf16.msra.mxu0 0
    %778 = vmatprep.mubr.bf16.mxu0 0
    %779 = vmatmul.mubr.bf16.gmra.mrb[0].mxu0 %v744
    %v780 = vpop.f32.mrb[0].mxu0
    %v781 = vadd.f32 %v731, %v780
    %v782 = vpop.f32.mrb[0].mxu0
    %v783 = vpop.f32.mrb[0].mxu0
    %v784 = vpop.f32.mrb[0].mxu0
    %785 = vdwg.mxu0
    %v786 = vld [vmem:[#allocation2] sm:$0x30]
    %v787 = vld [vmem:[#allocation2 + $0x8] sm:$0x30]
    %v788 = vpack.c.bf16 %v786, %v786
    %v789 = vpack.c.bf16 %v787, %v787
    %s790 = scalar_lea.vmem %s3, 96
    %v791 = vld [vmem:[%s790] sm:$0xf]
    %v792 = vld [vmem:[%s790 + $0x4] sm:$0xf]
    %v793 = vld [vmem:[%s790 + $0x8] sm:$0xf]
    %v794 = vld [vmem:[%s790 + $0xc] sm:$0xf]
    %v795 = vld [vmem:[%s790 + $0x10] sm:$0xf]
    %v796 = vld [vmem:[%s790 + $0x14] sm:$0xf]
    %v797 = vld [vmem:[%s790 + $0x18] sm:$0xf]
    %v798 = vld [vmem:[%s790 + $0x1c] sm:$0xf]
    %v799 = vld [vmem:[%s790 + $0x20] sm:$0xf]
    %v800 = vld [vmem:[%s790 + $0x24] sm:$0xf]
    %v801 = vld [vmem:[%s790 + $0x28] sm:$0xf]
    %v802 = vld [vmem:[%s790 + $0x2c] sm:$0xf]
    %v804 = vrot.slane %v788, 2
    %v817 = vunpack.c.l.b16 %v791
    %v818 = vunpack.c.l.b16 %v792
    %v819 = vunpack.c.l.b16 %v793
    %v820 = vunpack.c.l.b16 %v794
    %v821 = vunpack.c.l.b16 %v795
    %v822 = vunpack.c.l.b16 %v796
    %v823 = vunpack.c.l.b16 %v797
    %v824 = vunpack.c.l.b16 %v798
    %v825 = vunpack.c.l.b16 %v799
    %v826 = vunpack.c.l.b16 %v800
    %v827 = vunpack.c.l.b16 %v801
    %v828 = vunpack.c.l.b16 %v802
    %v829 = vpack.c.b16 %v818, %v817
    %v830 = vpack.c.b16 %v820, %v819
    %v831 = vpack.c.b16 %v822, %v821
    %v832 = vpack.c.b16 %v824, %v823
    %v833 = vpack.c.b16 %v826, %v825
    %v834 = vpack.c.b16 %v828, %v827
    %v842 = vsel %vm562, %v804, 0
    %844 = vmatprep.subr.bf16.mxu0 0
    %845 = vmatpush1.bf16.msra.mxu0 %v829
    %846 = vmatprep.subr.bf16.mxu0 0
    %847 = vmatpush1.bf16.msra.mxu0 %v830
    %848 = vmatprep.subr.bf16.mxu0 0
    %849 = vmatpush1.bf16.msra.mxu0 %v831
    %850 = vmatprep.subr.bf16.mxu0 0
    %851 = vmatpush1.bf16.msra.mxu0 %v832
    %852 = vmatprep.subr.bf16.mxu0 0
    %853 = vmatpush1.bf16.msra.mxu0 %v833
    %854 = vmatprep.subr.bf16.mxu0 0
    %855 = vmatpush1.bf16.msra.mxu0 %v834
    %856 = vmatprep.subr.bf16.mxu0 0
    %857 = vmatpush1.bf16.msra.mxu0 0
    %858 = vmatprep.subr.bf16.mxu0 0
    %859 = vmatpush1.bf16.msra.mxu0 0
    %860 = vmatprep.subr.bf16.mxu0 0
    %861 = vmatpush1.bf16.msra.mxu0 0
    %862 = vmatprep.subr.bf16.mxu0 0
    %863 = vmatpush1.bf16.msra.mxu0 0
    %864 = vmatprep.subr.bf16.mxu0 0
    %865 = vmatpush1.bf16.msra.mxu0 0
    %866 = vmatprep.subr.bf16.mxu0 0
    %867 = vmatpush1.bf16.msra.mxu0 0
    %868 = vmatprep.subr.bf16.mxu0 0
    %869 = vmatpush1.bf16.msra.mxu0 0
    %870 = vmatprep.subr.bf16.mxu0 0
    %871 = vmatpush1.bf16.msra.mxu0 0
    %872 = vmatprep.subr.bf16.mxu0 0
    %873 = vmatpush1.bf16.msra.mxu0 0
    %874 = vmatprep.subr.bf16.mxu0 0
    %875 = vmatpush1.bf16.msra.mxu0 0
    %876 = vmatprep.mubr.bf16.mxu0 0
    %877 = vmatmul.mubr.bf16.gmra.mrb[0].mxu0 %v842
    %v878 = vpop.f32.mrb[0].mxu0
    %v879 = vadd.f32 0.0, %v878
    %v880 = vpop.f32.mrb[0].mxu0
    %v881 = vpop.f32.mrb[0].mxu0
    %v882 = vpop.f32.mrb[0].mxu0
    %883 = vdwg.mxu0
    %v884 = vadd.f32 %v680, %v879
    %v886 = vrot.slane %v789, 2
    %887 = vrot.lane.b32.xlu0 %v804, 64
    %v888 = vpop.permute.xlu0 %887
    %889 = vrot.lane.b32.xlu0 %v886, 64
    %v890 = vpop.permute.xlu0 %889
    %v891 = vsel %vm691, %v888, %v890
    %v893 = vsel %vm562, %v891, 0
    %895 = vmatprep.subr.bf16.mxu0 0
    %896 = vmatpush1.bf16.msra.mxu0 %v829
    %897 = vmatprep.subr.bf16.mxu0 0
    %898 = vmatpush1.bf16.msra.mxu0 %v830
    %899 = vmatprep.subr.bf16.mxu0 0
    %900 = vmatpush1.bf16.msra.mxu0 %v831
    %901 = vmatprep.subr.bf16.mxu0 0
    %902 = vmatpush1.bf16.msra.mxu0 %v832
    %903 = vmatprep.subr.bf16.mxu0 0
    %904 = vmatpush1.bf16.msra.mxu0 %v833
    %905 = vmatprep.subr.bf16.mxu0 0
    %906 = vmatpush1.bf16.msra.mxu0 %v834
    %907 = vmatprep.subr.bf16.mxu0 0
    %908 = vmatpush1.bf16.msra.mxu0 0
    %909 = vmatprep.subr.bf16.mxu0 0
    %910 = vmatpush1.bf16.msra.mxu0 0
    %911 = vmatprep.subr.bf16.mxu0 0
    %912 = vmatpush1.bf16.msra.mxu0 0
    %913 = vmatprep.subr.bf16.mxu0 0
    %914 = vmatpush1.bf16.msra.mxu0 0
    %915 = vmatprep.subr.bf16.mxu0 0
    %916 = vmatpush1.bf16.msra.mxu0 0
    %917 = vmatprep.subr.bf16.mxu0 0
    %918 = vmatpush1.bf16.msra.mxu0 0
    %919 = vmatprep.subr.bf16.mxu0 0
    %920 = vmatpush1.bf16.msra.mxu0 0
    %921 = vmatprep.subr.bf16.mxu0 0
    %922 = vmatpush1.bf16.msra.mxu0 0
    %923 = vmatprep.subr.bf16.mxu0 0
    %924 = vmatpush1.bf16.msra.mxu0 0
    %925 = vmatprep.subr.bf16.mxu0 0
    %926 = vmatpush1.bf16.msra.mxu0 0
    %927 = vmatprep.mubr.bf16.mxu0 0
    %928 = vmatmul.mubr.bf16.gmra.mrb[0].mxu0 %v893
    %v929 = vpop.f32.mrb[0].mxu0
    %v930 = vadd.f32 0.0, %v929
    %v931 = vpop.f32.mrb[0].mxu0
    %v932 = vpop.f32.mrb[0].mxu0
    %v933 = vpop.f32.mrb[0].mxu0
    %934 = vdwg.mxu0
    %v935 = vadd.f32 %v781, %v930
    %v936 = vld [vmem:[#allocation2] sm:$0xc0]
    %v937 = vld [vmem:[#allocation2 + $0x8] sm:$0xc0]
    %v938 = vpack.c.bf16 %v936, %v936
    %v939 = vpack.c.bf16 %v937, %v937
    %v941 = vrot.slane %v938, 3
    %v943 = vsel %vm562, %v941, 0
    %945 = vmatprep.subr.bf16.mxu0 0
    %946 = vmatpush1.bf16.msra.mxu0 %v550
    %947 = vmatprep.subr.bf16.mxu0 0
    %948 = vmatpush1.bf16.msra.mxu0 %v551
    %949 = vmatprep.subr.bf16.mxu0 0
    %950 = vmatpush1.bf16.msra.mxu0 %v552
    %951 = vmatprep.subr.bf16.mxu0 0
    %952 = vmatpush1.bf16.msra.mxu0 %v553
    %953 = vmatprep.subr.bf16.mxu0 0
    %954 = vmatpush1.bf16.msra.mxu0 %v554
    %955 = vmatprep.subr.bf16.mxu0 0
    %956 = vmatpush1.bf16.msra.mxu0 %v555
    %957 = vmatprep.subr.bf16.mxu0 0
    %958 = vmatpush1.bf16.msra.mxu0 0
    %959 = vmatprep.subr.bf16.mxu0 0
    %960 = vmatpush1.bf16.msra.mxu0 0
    %961 = vmatprep.subr.bf16.mxu0 0
    %962 = vmatpush1.bf16.msra.mxu0 0
    %963 = vmatprep.subr.bf16.mxu0 0
    %964 = vmatpush1.bf16.msra.mxu0 0
    %965 = vmatprep.subr.bf16.mxu0 0
    %966 = vmatpush1.bf16.msra.mxu0 0
    %967 = vmatprep.subr.bf16.mxu0 0
    %968 = vmatpush1.bf16.msra.mxu0 0
    %969 = vmatprep.subr.bf16.mxu0 0
    %970 = vmatpush1.bf16.msra.mxu0 0
    %971 = vmatprep.subr.bf16.mxu0 0
    %972 = vmatpush1.bf16.msra.mxu0 0
    %973 = vmatprep.subr.bf16.mxu0 0
    %974 = vmatpush1.bf16.msra.mxu0 0
    %975 = vmatprep.subr.bf16.mxu0 0
    %976 = vmatpush1.bf16.msra.mxu0 0
    %977 = vmatprep.mubr.bf16.mxu0 0
    %978 = vmatmul.mubr.bf16.gmra.mrb[0].mxu0 %v943
    %v979 = vpop.f32.mrb[0].mxu0
    %v980 = vadd.f32 0.0, %v979
    %v981 = vpop.f32.mrb[0].mxu0
    %v982 = vpop.f32.mrb[0].mxu0
    %v983 = vpop.f32.mrb[0].mxu0
    %984 = vdwg.mxu0
    %985 = vmatprep.subr.bf16.mxu0 0
    %986 = vmatpush1.bf16.msra.mxu0 %v630
    %987 = vmatprep.subr.bf16.mxu0 0
    %988 = vmatpush1.bf16.msra.mxu0 %v631
    %989 = vmatprep.subr.bf16.mxu0 0
    %990 = vmatpush1.bf16.msra.mxu0 %v632
    %991 = vmatprep.subr.bf16.mxu0 0
    %992 = vmatpush1.bf16.msra.mxu0 %v633
    %993 = vmatprep.subr.bf16.mxu0 0
    %994 = vmatpush1.bf16.msra.mxu0 %v634
    %995 = vmatprep.subr.bf16.mxu0 0
    %996 = vmatpush1.bf16.msra.mxu0 %v635
    %997 = vmatprep.subr.bf16.mxu0 0
    %998 = vmatpush1.bf16.msra.mxu0 0
    %999 = vmatprep.subr.bf16.mxu0 0
    %1000 = vmatpush1.bf16.msra.mxu0 0
    %1001 = vmatprep.subr.bf16.mxu0 0
    %1002 = vmatpush1.bf16.msra.mxu0 0
    %1003 = vmatprep.subr.bf16.mxu0 0
    %1004 = vmatpush1.bf16.msra.mxu0 0
    %1005 = vmatprep.subr.bf16.mxu0 0
    %1006 = vmatpush1.bf16.msra.mxu0 0
    %1007 = vmatprep.subr.bf16.mxu0 0
    %1008 = vmatpush1.bf16.msra.mxu0 0
    %1009 = vmatprep.subr.bf16.mxu0 0
    %1010 = vmatpush1.bf16.msra.mxu0 0
    %1011 = vmatprep.subr.bf16.mxu0 0
    %1012 = vmatpush1.bf16.msra.mxu0 0
    %1013 = vmatprep.subr.bf16.mxu0 0
    %1014 = vmatpush1.bf16.msra.mxu0 0
    %1015 = vmatprep.subr.bf16.mxu0 0
    %1016 = vmatpush1.bf16.msra.mxu0 0
    %1017 = vmatprep.mubr.bf16.mxu0 0
    %1018 = vmatmul.mubr.bf16.gmra.mrb[0].mxu0 %v842
    %v1019 = vpop.f32.mrb[0].mxu0
    %v1020 = vadd.f32 %v980, %v1019
    %v1021 = vpop.f32.mrb[0].mxu0
    %v1022 = vpop.f32.mrb[0].mxu0
    %v1023 = vpop.f32.mrb[0].mxu0
    %1024 = vdwg.mxu0
    %v1026 = vrot.slane %v939, 3
    %1027 = vrot.lane.b32.xlu0 %v941, 64
    %v1028 = vpop.permute.xlu0 %1027
    %1029 = vrot.lane.b32.xlu0 %v1026, 64
    %v1030 = vpop.permute.xlu0 %1029
    %v1031 = vsel %vm691, %v1028, %v1030
    %v1033 = vsel %vm562, %v1031, 0
    %1035 = vmatprep.subr.bf16.mxu0 0
    %1036 = vmatpush1.bf16.msra.mxu0 %v550
    %1037 = vmatprep.subr.bf16.mxu0 0
    %1038 = vmatpush1.bf16.msra.mxu0 %v551
    %1039 = vmatprep.subr.bf16.mxu0 0
    %1040 = vmatpush1.bf16.msra.mxu0 %v552
    %1041 = vmatprep.subr.bf16.mxu0 0
    %1042 = vmatpush1.bf16.msra.mxu0 %v553
    %1043 = vmatprep.subr.bf16.mxu0 0
    %1044 = vmatpush1.bf16.msra.mxu0 %v554
    %1045 = vmatprep.subr.bf16.mxu0 0
    %1046 = vmatpush1.bf16.msra.mxu0 %v555
    %1047 = vmatprep.subr.bf16.mxu0 0
    %1048 = vmatpush1.bf16.msra.mxu0 0
    %1049 = vmatprep.subr.bf16.mxu0 0
    %1050 = vmatpush1.bf16.msra.mxu0 0
    %1051 = vmatprep.subr.bf16.mxu0 0
    %1052 = vmatpush1.bf16.msra.mxu0 0
    %1053 = vmatprep.subr.bf16.mxu0 0
    %1054 = vmatpush1.bf16.msra.mxu0 0
    %1055 = vmatprep.subr.bf16.mxu0 0
    %1056 = vmatpush1.bf16.msra.mxu0 0
    %1057 = vmatprep.subr.bf16.mxu0 0
    %1058 = vmatpush1.bf16.msra.mxu0 0
    %1059 = vmatprep.subr.bf16.mxu0 0
    %1060 = vmatpush1.bf16.msra.mxu0 0
    %1061 = vmatprep.subr.bf16.mxu0 0
    %1062 = vmatpush1.bf16.msra.mxu0 0
    %1063 = vmatprep.subr.bf16.mxu0 0
    %1064 = vmatpush1.bf16.msra.mxu0 0
    %1065 = vmatprep.subr.bf16.mxu0 0
    %1066 = vmatpush1.bf16.msra.mxu0 0
    %1067 = vmatprep.mubr.bf16.mxu0 0
    %1068 = vmatmul.mubr.bf16.gmra.mrb[0].mxu0 %v1033
    %v1069 = vpop.f32.mrb[0].mxu0
    %v1070 = vadd.f32 0.0, %v1069
    %v1071 = vpop.f32.mrb[0].mxu0
    %v1072 = vpop.f32.mrb[0].mxu0
    %v1073 = vpop.f32.mrb[0].mxu0
    %1074 = vdwg.mxu0
    %1075 = vmatprep.subr.bf16.mxu0 0
    %1076 = vmatpush1.bf16.msra.mxu0 %v630
    %1077 = vmatprep.subr.bf16.mxu0 0
    %1078 = vmatpush1.bf16.msra.mxu0 %v631
    %1079 = vmatprep.subr.bf16.mxu0 0
    %1080 = vmatpush1.bf16.msra.mxu0 %v632
    %1081 = vmatprep.subr.bf16.mxu0 0
    %1082 = vmatpush1.bf16.msra.mxu0 %v633
    %1083 = vmatprep.subr.bf16.mxu0 0
    %1084 = vmatpush1.bf16.msra.mxu0 %v634
    %1085 = vmatprep.subr.bf16.mxu0 0
    %1086 = vmatpush1.bf16.msra.mxu0 %v635
    %1087 = vmatprep.subr.bf16.mxu0 0
    %1088 = vmatpush1.bf16.msra.mxu0 0
    %1089 = vmatprep.subr.bf16.mxu0 0
    %1090 = vmatpush1.bf16.msra.mxu0 0
    %1091 = vmatprep.subr.bf16.mxu0 0
    %1092 = vmatpush1.bf16.msra.mxu0 0
    %1093 = vmatprep.subr.bf16.mxu0 0
    %1094 = vmatpush1.bf16.msra.mxu0 0
    %1095 = vmatprep.subr.bf16.mxu0 0
    %1096 = vmatpush1.bf16.msra.mxu0 0
    %1097 = vmatprep.subr.bf16.mxu0 0
    %1098 = vmatpush1.bf16.msra.mxu0 0
    %1099 = vmatprep.subr.bf16.mxu0 0
    %1100 = vmatpush1.bf16.msra.mxu0 0
    %1101 = vmatprep.subr.bf16.mxu0 0
    %1102 = vmatpush1.bf16.msra.mxu0 0
    %1103 = vmatprep.subr.bf16.mxu0 0
    %1104 = vmatpush1.bf16.msra.mxu0 0
    %1105 = vmatprep.subr.bf16.mxu0 0
    %1106 = vmatpush1.bf16.msra.mxu0 0
    %1107 = vmatprep.mubr.bf16.mxu0 0
    %1108 = vmatmul.mubr.bf16.gmra.mrb[0].mxu0 %v893
    %v1109 = vpop.f32.mrb[0].mxu0
    %v1110 = vadd.f32 %v1070, %v1109
    %v1111 = vpop.f32.mrb[0].mxu0
    %v1112 = vpop.f32.mrb[0].mxu0
    %v1113 = vpop.f32.mrb[0].mxu0
    %1114 = vdwg.mxu0
    %v1115 = vld [vmem:[#allocation2 + $0x10] sm:$0x3]
    %v1116 = vld [vmem:[#allocation2 + $0x18] sm:$0x3]
    %v1117 = vpack.c.bf16 %v1115, %v1115
    %v1118 = vpack.c.bf16 %v1116, %v1116
    %v1120 = vsel %vm562, %v1117, 0
    %1122 = vmatprep.subr.bf16.mxu0 0
    %1123 = vmatpush1.bf16.msra.mxu0 %v829
    %1124 = vmatprep.subr.bf16.mxu0 0
    %1125 = vmatpush1.bf16.msra.mxu0 %v830
    %1126 = vmatprep.subr.bf16.mxu0 0
    %1127 = vmatpush1.bf16.msra.mxu0 %v831
    %1128 = vmatprep.subr.bf16.mxu0 0
    %1129 = vmatpush1.bf16.msra.mxu0 %v832
    %1130 = vmatprep.subr.bf16.mxu0 0
    %1131 = vmatpush1.bf16.msra.mxu0 %v833
    %1132 = vmatprep.subr.bf16.mxu0 0
    %1133 = vmatpush1.bf16.msra.mxu0 %v834
    %1134 = vmatprep.subr.bf16.mxu0 0
    %1135 = vmatpush1.bf16.msra.mxu0 0
    %1136 = vmatprep.subr.bf16.mxu0 0
    %1137 = vmatpush1.bf16.msra.mxu0 0
    %1138 = vmatprep.subr.bf16.mxu0 0
    %1139 = vmatpush1.bf16.msra.mxu0 0
    %1140 = vmatprep.subr.bf16.mxu0 0
    %1141 = vmatpush1.bf16.msra.mxu0 0
    %1142 = vmatprep.subr.bf16.mxu0 0
    %1143 = vmatpush1.bf16.msra.mxu0 0
    %1144 = vmatprep.subr.bf16.mxu0 0
    %1145 = vmatpush1.bf16.msra.mxu0 0
    %1146 = vmatprep.subr.bf16.mxu0 0
    %1147 = vmatpush1.bf16.msra.mxu0 0
    %1148 = vmatprep.subr.bf16.mxu0 0
    %1149 = vmatpush1.bf16.msra.mxu0 0
    %1150 = vmatprep.subr.bf16.mxu0 0
    %1151 = vmatpush1.bf16.msra.mxu0 0
    %1152 = vmatprep.subr.bf16.mxu0 0
    %1153 = vmatpush1.bf16.msra.mxu0 0
    %1154 = vmatprep.mubr.bf16.mxu0 0
    %1155 = vmatmul.mubr.bf16.gmra.mrb[0].mxu0 %v1120
    %v1156 = vpop.f32.mrb[0].mxu0
    %v1157 = vadd.f32 0.0, %v1156
    %v1158 = vpop.f32.mrb[0].mxu0
    %v1159 = vpop.f32.mrb[0].mxu0
    %v1160 = vpop.f32.mrb[0].mxu0
    %1161 = vdwg.mxu0
    %v1162 = vadd.f32 %v1020, %v1157
    %1165 = vrot.lane.b32.xlu0 %v1117, 64
    %v1166 = vpop.permute.xlu0 %1165
    %1167 = vrot.lane.b32.xlu0 %v1118, 64
    %v1168 = vpop.permute.xlu0 %1167
    %v1169 = vsel %vm691, %v1166, %v1168
    %v1171 = vsel %vm562, %v1169, 0
    %1173 = vmatprep.subr.bf16.mxu0 0
    %1174 = vmatpush1.bf16.msra.mxu0 %v829
    %1175 = vmatprep.subr.bf16.mxu0 0
    %1176 = vmatpush1.bf16.msra.mxu0 %v830
    %1177 = vmatprep.subr.bf16.mxu0 0
    %1178 = vmatpush1.bf16.msra.mxu0 %v831
    %1179 = vmatprep.subr.bf16.mxu0 0
    %1180 = vmatpush1.bf16.msra.mxu0 %v832
    %1181 = vmatprep.subr.bf16.mxu0 0
    %1182 = vmatpush1.bf16.msra.mxu0 %v833
    %1183 = vmatprep.subr.bf16.mxu0 0
    %1184 = vmatpush1.bf16.msra.mxu0 %v834
    %1185 = vmatprep.subr.bf16.mxu0 0
    %1186 = vmatpush1.bf16.msra.mxu0 0
    %1187 = vmatprep.subr.bf16.mxu0 0
    %1188 = vmatpush1.bf16.msra.mxu0 0
    %1189 = vmatprep.subr.bf16.mxu0 0
    %1190 = vmatpush1.bf16.msra.mxu0 0
    %1191 = vmatprep.subr.bf16.mxu0 0
    %1192 = vmatpush1.bf16.msra.mxu0 0
    %1193 = vmatprep.subr.bf16.mxu0 0
    %1194 = vmatpush1.bf16.msra.mxu0 0
    %1195 = vmatprep.subr.bf16.mxu0 0
    %1196 = vmatpush1.bf16.msra.mxu0 0
    %1197 = vmatprep.subr.bf16.mxu0 0
    %1198 = vmatpush1.bf16.msra.mxu0 0
    %1199 = vmatprep.subr.bf16.mxu0 0
    %1200 = vmatpush1.bf16.msra.mxu0 0
    %1201 = vmatprep.subr.bf16.mxu0 0
    %1202 = vmatpush1.bf16.msra.mxu0 0
    %1203 = vmatprep.subr.bf16.mxu0 0
    %1204 = vmatpush1.bf16.msra.mxu0 0
    %1205 = vmatprep.mubr.bf16.mxu0 0
    %1206 = vmatmul.mubr.bf16.gmra.mrb[0].mxu0 %v1171
    %v1207 = vpop.f32.mrb[0].mxu0
    %v1208 = vadd.f32 0.0, %v1207
    %v1209 = vpop.f32.mrb[0].mxu0
    %v1210 = vpop.f32.mrb[0].mxu0
    %v1211 = vpop.f32.mrb[0].mxu0
    %1212 = vdwg.mxu0
    %v1213 = vadd.f32 %v1110, %v1208
    %v1215 = vlaneseq
    %v1216 = vshrl.u32 %v1215, 7
    %v1217 = vsub.s32 0, %v1216
    %v1218 = vrot.slane %v490, %v1217
    %v1220 = vadd.f32 %v884, %v1218
    %v1221 = vmax.f32 %v1220, 0.0
    %v1222 = vpack.c.bf16 %v1221, %v1221
    %v1223 = vadd.f32 %v935, %v1218
    %v1224 = vmax.f32 %v1223, 0.0
    %v1225 = vpack.c.bf16 %v1224, %v1224
    %v1226 = vadd.f32 %v1162, %v1218
    %v1227 = vmax.f32 %v1226, 0.0
    %v1228 = vpack.c.bf16 %v1227, %v1227
    %v1229 = vadd.f32 %v1213, %v1218
    %v1230 = vmax.f32 %v1229, 0.0
    %v1231 = vpack.c.bf16 %v1230, %v1230
    %1233 = vrot.lane.b32.xlu0 %v1225, 64
    %v1234 = vpop.permute.xlu0 %1233
    %1236 = vrot.lane.b32.xlu0 %v1231, 64
    %v1237 = vpop.permute.xlu0 %1236
    %vm1238 = vcmask 523264
    %v1241 = vsel %vm1238, %v1222, %v1234
    %v1245 = vsel %vm1238, %v1228, %v1237
    %v1247 = vld [vmem:[%s5] sm:$0xff]
    %v1248 = vld [vmem:[%s5 + $0x8] sm:$0xff]
    %v1249 = vld [vmem:[%s5 + $0x10] sm:$0xff]
    %v1250 = vld [vmem:[%s5 + $0x18] sm:$0xff]
    %v1251 = vld [vmem:[%s5 + $0x20] sm:$0xff]
    %v1252 = vld [vmem:[%s5 + $0x28] sm:$0xff]
    %v1253 = vld [vmem:[%s5 + $0x30] sm:$0xff]
    %v1254 = vld [vmem:[%s5 + $0x38] sm:$0xff]
    %v1255 = vld [vmem:[%s5 + $0x40] sm:$0xff]
    %v1256 = vld [vmem:[%s5 + $0x48] sm:$0xff]
    %v1257 = vld [vmem:[%s5 + $0x50] sm:$0xff]
    %v1258 = vld [vmem:[%s5 + $0x58] sm:$0xff]
    %v1259 = vld [vmem:[%s5 + $0x60] sm:$0xff]
    %v1260 = vld [vmem:[%s5 + $0x68] sm:$0xff]
    %v1261 = vld [vmem:[%s5 + $0x70] sm:$0xff]
    %v1262 = vld [vmem:[%s5 + $0x78] sm:$0xff]
    %v1263 = vld [vmem:[%s5 + $0x80] sm:$0xff]
    %v1264 = vld [vmem:[%s5 + $0x88] sm:$0xff]
    %v1265 = vld [vmem:[%s5 + $0x90] sm:$0xff]
    %v1266 = vld [vmem:[%s5 + $0x98] sm:$0xff]
    %v1267 = vld [vmem:[%s5 + $0xa0] sm:$0xff]
    %v1268 = vld [vmem:[%s5 + $0xa8] sm:$0xff]
    %v1269 = vld [vmem:[%s5 + $0xb0] sm:$0xff]
    %v1270 = vld [vmem:[%s5 + $0xb8] sm:$0xff]
    %v1271 = vld [vmem:[%s5 + $0xc0] sm:$0xff]
    %v1272 = vld [vmem:[%s5 + $0xc8] sm:$0xff]
    %v1273 = vld [vmem:[%s5 + $0xd0] sm:$0xff]
    %v1274 = vld [vmem:[%s5 + $0xd8] sm:$0xff]
    %v1275 = vld [vmem:[%s5 + $0xe0] sm:$0xff]
    %v1276 = vld [vmem:[%s5 + $0xe8] sm:$0xff]
    %v1277 = vld [vmem:[%s5 + $0xf0] sm:$0xff]
    %v1278 = vld [vmem:[%s5 + $0xf8] sm:$0xff]
    %v1279 = vld [vmem:[%s5 + $0x100] sm:$0xff]
    %v1280 = vld [vmem:[%s5 + $0x108] sm:$0xff]
    %v1281 = vld [vmem:[%s5 + $0x110] sm:$0xff]
    %v1282 = vld [vmem:[%s5 + $0x118] sm:$0xff]
    %v1283 = vld [vmem:[%s5 + $0x120] sm:$0xff]
    %v1284 = vld [vmem:[%s5 + $0x128] sm:$0xff]
    %v1285 = vld [vmem:[%s5 + $0x130] sm:$0xff]
    %v1286 = vld [vmem:[%s5 + $0x138] sm:$0xff]
    %v1287 = vld [vmem:[%s5 + $0x140] sm:$0xff]
    %v1288 = vld [vmem:[%s5 + $0x148] sm:$0xff]
    %v1289 = vld [vmem:[%s5 + $0x150] sm:$0xff]
    %v1290 = vld [vmem:[%s5 + $0x158] sm:$0xff]
    %v1291 = vld [vmem:[%s5 + $0x160] sm:$0xff]
    %v1292 = vld [vmem:[%s5 + $0x168] sm:$0xff]
    %v1293 = vld [vmem:[%s5 + $0x170] sm:$0xff]
    %v1294 = vld [vmem:[%s5 + $0x178] sm:$0xff]
    %v1295 = vld [vmem:[%s5 + $0x180] sm:$0xff]
    %v1296 = vld [vmem:[%s5 + $0x188] sm:$0xff]
    %v1297 = vld [vmem:[%s5 + $0x190] sm:$0xff]
    %v1298 = vld [vmem:[%s5 + $0x198] sm:$0xff]
    %v1299 = vld [vmem:[%s5 + $0x1a0] sm:$0xff]
    %v1300 = vld [vmem:[%s5 + $0x1a8] sm:$0xff]
    %v1301 = vld [vmem:[%s5 + $0x1b0] sm:$0xff]
    %v1302 = vld [vmem:[%s5 + $0x1b8] sm:$0xff]
    %v1303 = vld [vmem:[%s5 + $0x1c0] sm:$0xff]
    %v1304 = vld [vmem:[%s5 + $0x1c8] sm:$0xff]
    %v1305 = vld [vmem:[%s5 + $0x1d0] sm:$0xff]
    %v1306 = vld [vmem:[%s5 + $0x1d8] sm:$0xff]
    %v1307 = vld [vmem:[%s5 + $0x1e0] sm:$0xff]
    %v1308 = vld [vmem:[%s5 + $0x1e8] sm:$0xff]
    %v1309 = vld [vmem:[%s5 + $0x1f0] sm:$0xff]
    %v1310 = vld [vmem:[%s5 + $0x1f8] sm:$0xff]
    %v1311 = vld [vmem:[%s6] sm:$0xf]
    %v1313 = vlaneseq
    %v1314 = vshrl.u32 %v1313, 7
    %v1315 = vsub.s32 0, %v1314
    %v1316 = vrot.slane %v1311, %v1315
    %v1317 = vlaneseq
    %v1318 = vshrl.u32 %v1317, 7
    %v1319 = vsub.s32 1, %v1318
    %v1320 = vrot.slane %v1311, %v1319
    %v1321 = vlaneseq
    %v1322 = vshrl.u32 %v1321, 7
    %v1323 = vsub.s32 2, %v1322
    %v1324 = vrot.slane %v1311, %v1323
    %v1325 = vlaneseq
    %v1326 = vshrl.u32 %v1325, 7
    %v1327 = vsub.s32 3, %v1326
    %v1328 = vrot.slane %v1311, %v1327
    %v1397 = vunpack.c.l.b16 %v1247
    %v1398 = vunpack.c.h.b16 %v1247
    %v1399 = vunpack.c.l.b16 %v1248
    %v1400 = vunpack.c.h.b16 %v1248
    %v1401 = vunpack.c.l.b16 %v1249
    %v1402 = vunpack.c.h.b16 %v1249
    %v1403 = vunpack.c.l.b16 %v1250
    %v1404 = vunpack.c.h.b16 %v1250
    %v1405 = vunpack.c.l.b16 %v1251
    %v1406 = vunpack.c.h.b16 %v1251
    %v1407 = vunpack.c.l.b16 %v1252
    %v1408 = vunpack.c.h.b16 %v1252
    %v1409 = vunpack.c.l.b16 %v1253
    %v1410 = vunpack.c.h.b16 %v1253
    %v1411 = vunpack.c.l.b16 %v1254
    %v1412 = vunpack.c.h.b16 %v1254
    %v1413 = vunpack.c.l.b16 %v1255
    %v1414 = vunpack.c.h.b16 %v1255
    %v1415 = vunpack.c.l.b16 %v1256
    %v1416 = vunpack.c.h.b16 %v1256
    %v1417 = vunpack.c.l.b16 %v1257
    %v1418 = vunpack.c.h.b16 %v1257
    %v1419 = vunpack.c.l.b16 %v1258
    %v1420 = vunpack.c.h.b16 %v1258
    %v1421 = vunpack.c.l.b16 %v1259
    %v1422 = vunpack.c.h.b16 %v1259
    %v1423 = vunpack.c.l.b16 %v1260
    %v1424 = vunpack.c.h.b16 %v1260
    %v1425 = vunpack.c.l.b16 %v1261
    %v1426 = vunpack.c.h.b16 %v1261
    %v1427 = vunpack.c.l.b16 %v1262
    %v1428 = vunpack.c.h.b16 %v1262
    %v1429 = vunpack.c.l.b16 %v1263
    %v1430 = vunpack.c.h.b16 %v1263
    %v1431 = vunpack.c.l.b16 %v1264
    %v1432 = vunpack.c.h.b16 %v1264
    %v1433 = vunpack.c.l.b16 %v1265
    %v1434 = vunpack.c.h.b16 %v1265
    %v1435 = vunpack.c.l.b16 %v1266
    %v1436 = vunpack.c.h.b16 %v1266
    %v1437 = vunpack.c.l.b16 %v1267
    %v1438 = vunpack.c.h.b16 %v1267
    %v1439 = vunpack.c.l.b16 %v1268
    %v1440 = vunpack.c.h.b16 %v1268
    %v1441 = vunpack.c.l.b16 %v1269
    %v1442 = vunpack.c.h.b16 %v1269
    %v1443 = vunpack.c.l.b16 %v1270
    %v1444 = vunpack.c.h.b16 %v1270
    %v1445 = vunpack.c.l.b16 %v1271
    %v1446 = vunpack.c.h.b16 %v1271
    %v1447 = vunpack.c.l.b16 %v1272
    %v1448 = vunpack.c.h.b16 %v1272
    %v1449 = vunpack.c.l.b16 %v1273
    %v1450 = vunpack.c.h.b16 %v1273
    %v1451 = vunpack.c.l.b16 %v1274
    %v1452 = vunpack.c.h.b16 %v1274
    %v1453 = vunpack.c.l.b16 %v1275
    %v1454 = vunpack.c.h.b16 %v1275
    %v1455 = vunpack.c.l.b16 %v1276
    %v1456 = vunpack.c.h.b16 %v1276
    %v1457 = vunpack.c.l.b16 %v1277
    %v1458 = vunpack.c.h.b16 %v1277
    %v1459 = vunpack.c.l.b16 %v1278
    %v1460 = vunpack.c.h.b16 %v1278
    %v1461 = vunpack.c.l.b16 %v1279
    %v1462 = vunpack.c.h.b16 %v1279
    %v1463 = vunpack.c.l.b16 %v1280
    %v1464 = vunpack.c.h.b16 %v1280
    %v1465 = vunpack.c.l.b16 %v1281
    %v1466 = vunpack.c.h.b16 %v1281
    %v1467 = vunpack.c.l.b16 %v1282
    %v1468 = vunpack.c.h.b16 %v1282
    %v1469 = vunpack.c.l.b16 %v1283
    %v1470 = vunpack.c.h.b16 %v1283
    %v1471 = vunpack.c.l.b16 %v1284
    %v1472 = vunpack.c.h.b16 %v1284
    %v1473 = vunpack.c.l.b16 %v1285
    %v1474 = vunpack.c.h.b16 %v1285
    %v1475 = vunpack.c.l.b16 %v1286
    %v1476 = vunpack.c.h.b16 %v1286
    %v1477 = vunpack.c.l.b16 %v1287
    %v1478 = vunpack.c.h.b16 %v1287
    %v1479 = vunpack.c.l.b16 %v1288
    %v1480 = vunpack.c.h.b16 %v1288
    %v1481 = vunpack.c.l.b16 %v1289
    %v1482 = vunpack.c.h.b16 %v1289
    %v1483 = vunpack.c.l.b16 %v1290
    %v1484 = vunpack.c.h.b16 %v1290
    %v1485 = vunpack.c.l.b16 %v1291
    %v1486 = vunpack.c.h.b16 %v1291
    %v1487 = vunpack.c.l.b16 %v1292
    %v1488 = vunpack.c.h.b16 %v1292
    %v1489 = vunpack.c.l.b16 %v1293
    %v1490 = vunpack.c.h.b16 %v1293
    %v1491 = vunpack.c.l.b16 %v1294
    %v1492 = vunpack.c.h.b16 %v1294
    %v1493 = vunpack.c.l.b16 %v1295
    %v1494 = vunpack.c.h.b16 %v1295
    %v1495 = vunpack.c.l.b16 %v1296
    %v1496 = vunpack.c.h.b16 %v1296
    %v1497 = vunpack.c.l.b16 %v1297
    %v1498 = vunpack.c.h.b16 %v1297
    %v1499 = vunpack.c.l.b16 %v1298
    %v1500 = vunpack.c.h.b16 %v1298
    %v1501 = vunpack.c.l.b16 %v1299
    %v1502 = vunpack.c.h.b16 %v1299
    %v1503 = vunpack.c.l.b16 %v1300
    %v1504 = vunpack.c.h.b16 %v1300
    %v1505 = vunpack.c.l.b16 %v1301
    %v1506 = vunpack.c.h.b16 %v1301
    %v1507 = vunpack.c.l.b16 %v1302
    %v1508 = vunpack.c.h.b16 %v1302
    %v1509 = vunpack.c.l.b16 %v1303
    %v1510 = vunpack.c.h.b16 %v1303
    %v1511 = vunpack.c.l.b16 %v1304
    %v1512 = vunpack.c.h.b16 %v1304
    %v1513 = vunpack.c.l.b16 %v1305
    %v1514 = vunpack.c.h.b16 %v1305
    %v1515 = vunpack.c.l.b16 %v1306
    %v1516 = vunpack.c.h.b16 %v1306
    %v1517 = vunpack.c.l.b16 %v1307
    %v1518 = vunpack.c.h.b16 %v1307
    %v1519 = vunpack.c.l.b16 %v1308
    %v1520 = vunpack.c.h.b16 %v1308
    %v1521 = vunpack.c.l.b16 %v1309
    %v1522 = vunpack.c.h.b16 %v1309
    %v1523 = vunpack.c.l.b16 %v1310
    %v1524 = vunpack.c.h.b16 %v1310
    %v1525 = vpack.c.b16 %v1401, %v1397
    %v1526 = vpack.c.b16 %v1402, %v1398
    %v1527 = vpack.c.b16 %v1403, %v1399
    %v1528 = vpack.c.b16 %v1404, %v1400
    %v1529 = vpack.c.b16 %v1409, %v1405
    %v1530 = vpack.c.b16 %v1410, %v1406
    %v1531 = vpack.c.b16 %v1411, %v1407
    %v1532 = vpack.c.b16 %v1412, %v1408
    %v1533 = vpack.c.b16 %v1417, %v1413
    %v1534 = vpack.c.b16 %v1418, %v1414
    %v1535 = vpack.c.b16 %v1419, %v1415
    %v1536 = vpack.c.b16 %v1420, %v1416
    %v1537 = vpack.c.b16 %v1425, %v1421
    %v1538 = vpack.c.b16 %v1426, %v1422
    %v1539 = vpack.c.b16 %v1427, %v1423
    %v1540 = vpack.c.b16 %v1428, %v1424
    %v1541 = vpack.c.b16 %v1433, %v1429
    %v1542 = vpack.c.b16 %v1434, %v1430
    %v1543 = vpack.c.b16 %v1435, %v1431
    %v1544 = vpack.c.b16 %v1436, %v1432
    %v1545 = vpack.c.b16 %v1441, %v1437
    %v1546 = vpack.c.b16 %v1442, %v1438
    %v1547 = vpack.c.b16 %v1443, %v1439
    %v1548 = vpack.c.b16 %v1444, %v1440
    %v1549 = vpack.c.b16 %v1449, %v1445
    %v1550 = vpack.c.b16 %v1450, %v1446
    %v1551 = vpack.c.b16 %v1451, %v1447
    %v1552 = vpack.c.b16 %v1452, %v1448
    %v1553 = vpack.c.b16 %v1457, %v1453
    %v1554 = vpack.c.b16 %v1458, %v1454
    %v1555 = vpack.c.b16 %v1459, %v1455
    %v1556 = vpack.c.b16 %v1460, %v1456
    %v1557 = vpack.c.b16 %v1465, %v1461
    %v1558 = vpack.c.b16 %v1466, %v1462
    %v1559 = vpack.c.b16 %v1467, %v1463
    %v1560 = vpack.c.b16 %v1468, %v1464
    %v1561 = vpack.c.b16 %v1473, %v1469
    %v1562 = vpack.c.b16 %v1474, %v1470
    %v1563 = vpack.c.b16 %v1475, %v1471
    %v1564 = vpack.c.b16 %v1476, %v1472
    %v1565 = vpack.c.b16 %v1481, %v1477
    %v1566 = vpack.c.b16 %v1482, %v1478
    %v1567 = vpack.c.b16 %v1483, %v1479
    %v1568 = vpack.c.b16 %v1484, %v1480
    %v1569 = vpack.c.b16 %v1489, %v1485
    %v1570 = vpack.c.b16 %v1490, %v1486
    %v1571 = vpack.c.b16 %v1491, %v1487
    %v1572 = vpack.c.b16 %v1492, %v1488
    %v1573 = vpack.c.b16 %v1497, %v1493
    %v1574 = vpack.c.b16 %v1498, %v1494
    %v1575 = vpack.c.b16 %v1499, %v1495
    %v1576 = vpack.c.b16 %v1500, %v1496
    %v1577 = vpack.c.b16 %v1505, %v1501
    %v1578 = vpack.c.b16 %v1506, %v1502
    %v1579 = vpack.c.b16 %v1507, %v1503
    %v1580 = vpack.c.b16 %v1508, %v1504
    %v1581 = vpack.c.b16 %v1513, %v1509
    %v1582 = vpack.c.b16 %v1514, %v1510
    %v1583 = vpack.c.b16 %v1515, %v1511
    %v1584 = vpack.c.b16 %v1516, %v1512
    %v1585 = vpack.c.b16 %v1521, %v1517
    %v1586 = vpack.c.b16 %v1522, %v1518
    %v1587 = vpack.c.b16 %v1523, %v1519
    %v1588 = vpack.c.b16 %v1524, %v1520
    %1653 = vmatprep.subr.bf16.mxu0 %v1526
    %1654 = vmatpush1.bf16.msra.mxu0 %v1525
    %1655 = vmatprep.subr.bf16.mxu0 %v1530
    %1656 = vmatpush1.bf16.msra.mxu0 %v1529
    %1657 = vmatprep.subr.bf16.mxu0 %v1534
    %1658 = vmatpush1.bf16.msra.mxu0 %v1533
    %1659 = vmatprep.subr.bf16.mxu0 %v1538
    %1660 = vmatpush1.bf16.msra.mxu0 %v1537
    %1661 = vmatprep.subr.bf16.mxu0 %v1542
    %1662 = vmatpush1.bf16.msra.mxu0 %v1541
    %1663 = vmatprep.subr.bf16.mxu0 %v1546
    %1664 = vmatpush1.bf16.msra.mxu0 %v1545
    %1665 = vmatprep.subr.bf16.mxu0 %v1550
    %1666 = vmatpush1.bf16.msra.mxu0 %v1549
    %1667 = vmatprep.subr.bf16.mxu0 %v1554
    %1668 = vmatpush1.bf16.msra.mxu0 %v1553
    %1669 = vmatprep.subr.bf16.mxu0 %v1558
    %1670 = vmatpush1.bf16.msra.mxu0 %v1557
    %1671 = vmatprep.subr.bf16.mxu0 %v1562
    %1672 = vmatpush1.bf16.msra.mxu0 %v1561
    %1673 = vmatprep.subr.bf16.mxu0 %v1566
    %1674 = vmatpush1.bf16.msra.mxu0 %v1565
    %1675 = vmatprep.subr.bf16.mxu0 %v1570
    %1676 = vmatpush1.bf16.msra.mxu0 %v1569
    %1677 = vmatprep.subr.bf16.mxu0 %v1574
    %1678 = vmatpush1.bf16.msra.mxu0 %v1573
    %1679 = vmatprep.subr.bf16.mxu0 %v1578
    %1680 = vmatpush1.bf16.msra.mxu0 %v1577
    %1681 = vmatprep.subr.bf16.mxu0 %v1582
    %1682 = vmatpush1.bf16.msra.mxu0 %v1581
    %1683 = vmatprep.subr.bf16.mxu0 %v1586
    %1684 = vmatpush1.bf16.msra.mxu0 %v1585
    %1685 = vmatprep.mubr.bf16.mxu0 %v1245
    %1686 = vmatmul.mubr.bf16.gmra.mrb[0].mxu0 %v1241
    %v1687 = vpop.f32.mrb[0].mxu0
    %v1688 = vadd.f32 %v1316, %v1687
    %v1689 = vpop.f32.mrb[0].mxu0
    %v1690 = vadd.f32 %v1320, %v1689
    %v1691 = vpop.f32.mrb[0].mxu0
    %v1692 = vpop.f32.mrb[0].mxu0
    %1693 = vdwg.mxu0
    %1694 = vmatprep.subr.bf16.mxu0 %v1528
    %1695 = vmatpush1.bf16.msra.mxu0 %v1527
    %1696 = vmatprep.subr.bf16.mxu0 %v1532
    %1697 = vmatpush1.bf16.msra.mxu0 %v1531
    %1698 = vmatprep.subr.bf16.mxu0 %v1536
    %1699 = vmatpush1.bf16.msra.mxu0 %v1535
    %1700 = vmatprep.subr.bf16.mxu0 %v1540
    %1701 = vmatpush1.bf16.msra.mxu0 %v1539
    %1702 = vmatprep.subr.bf16.mxu0 %v1544
    %1703 = vmatpush1.bf16.msra.mxu0 %v1543
    %1704 = vmatprep.subr.bf16.mxu0 %v1548
    %1705 = vmatpush1.bf16.msra.mxu0 %v1547
    %1706 = vmatprep.subr.bf16.mxu0 %v1552
    %1707 = vmatpush1.bf16.msra.mxu0 %v1551
    %1708 = vmatprep.subr.bf16.mxu0 %v1556
    %1709 = vmatpush1.bf16.msra.mxu0 %v1555
    %1710 = vmatprep.subr.bf16.mxu0 %v1560
    %1711 = vmatpush1.bf16.msra.mxu0 %v1559
    %1712 = vmatprep.subr.bf16.mxu0 %v1564
    %1713 = vmatpush1.bf16.msra.mxu0 %v1563
    %1714 = vmatprep.subr.bf16.mxu0 %v1568
    %1715 = vmatpush1.bf16.msra.mxu0 %v1567
    %1716 = vmatprep.subr.bf16.mxu0 %v1572
    %1717 = vmatpush1.bf16.msra.mxu0 %v1571
    %1718 = vmatprep.subr.bf16.mxu0 %v1576
    %1719 = vmatpush1.bf16.msra.mxu0 %v1575
    %1720 = vmatprep.subr.bf16.mxu0 %v1580
    %1721 = vmatpush1.bf16.msra.mxu0 %v1579
    %1722 = vmatprep.subr.bf16.mxu0 %v1584
    %1723 = vmatpush1.bf16.msra.mxu0 %v1583
    %1724 = vmatprep.subr.bf16.mxu0 %v1588
    %1725 = vmatpush1.bf16.msra.mxu0 %v1587
    %1726 = vmatprep.mubr.bf16.mxu0 %v1245
    %1727 = vmatmul.mubr.bf16.gmra.mrb[0].mxu0 %v1241
    %v1728 = vpop.f32.mrb[0].mxu0
    %v1729 = vadd.f32 %v1324, %v1728
    %v1730 = vpop.f32.mrb[0].mxu0
    %v1731 = vadd.f32 %v1328, %v1730
    %v1732 = vpop.f32.mrb[0].mxu0
    %v1733 = vpop.f32.mrb[0].mxu0
    %1734 = vdwg.mxu0
    %v1735 = vmax.f32 %v1688, 0.0
    %v1736 = vmax.f32 %v1690, 0.0
    %v1737 = vmax.f32 %v1729, 0.0
    %v1738 = vmax.f32 %v1731, 0.0
    %v1739 = vpack.c.bf16 %v1735, %v1735
    %v1740 = vpack.c.bf16 %v1736, %v1736
    %v1741 = vpack.c.bf16 %v1737, %v1737
    %v1742 = vpack.c.bf16 %v1738, %v1738
    %v1743 = vld [vmem:[%s7] sm:$0xf]
    %v1744 = vld [vmem:[%s7 + $0x4] sm:$0xf]
    %v1745 = vld [vmem:[%s7 + $0x8] sm:$0xf]
    %v1746 = vld [vmem:[%s7 + $0xc] sm:$0xf]
    %v1747 = vld [vmem:[%s7 + $0x10] sm:$0xf]
    %v1748 = vld [vmem:[%s7 + $0x14] sm:$0xf]
    %v1749 = vld [vmem:[%s7 + $0x18] sm:$0xf]
    %v1750 = vld [vmem:[%s7 + $0x1c] sm:$0xf]
    %v1751 = vld [vmem:[%s7 + $0x20] sm:$0xf]
    %v1752 = vld [vmem:[%s7 + $0x24] sm:$0xf]
    %v1753 = vld [vmem:[%s7 + $0x28] sm:$0xf]
    %v1754 = vld [vmem:[%s7 + $0x2c] sm:$0xf]
    %v1755 = vld [vmem:[%s7 + $0x30] sm:$0xf]
    %v1756 = vld [vmem:[%s7 + $0x34] sm:$0xf]
    %v1757 = vld [vmem:[%s7 + $0x38] sm:$0xf]
    %v1758 = vld [vmem:[%s7 + $0x3c] sm:$0xf]
    %v1759 = vld [vmem:[%s7 + $0x40] sm:$0xf]
    %v1760 = vld [vmem:[%s7 + $0x44] sm:$0xf]
    %v1761 = vld [vmem:[%s7 + $0x48] sm:$0xf]
    %v1762 = vld [vmem:[%s7 + $0x4c] sm:$0xf]
    %v1763 = vld [vmem:[%s7 + $0x50] sm:$0xf]
    %v1764 = vld [vmem:[%s7 + $0x54] sm:$0xf]
    %v1765 = vld [vmem:[%s7 + $0x58] sm:$0xf]
    %v1766 = vld [vmem:[%s7 + $0x5c] sm:$0xf]
    %v1767 = vld [vmem:[%s7 + $0x60] sm:$0xf]
    %v1768 = vld [vmem:[%s7 + $0x64] sm:$0xf]
    %v1769 = vld [vmem:[%s7 + $0x68] sm:$0xf]
    %v1770 = vld [vmem:[%s7 + $0x6c] sm:$0xf]
    %v1771 = vld [vmem:[%s7 + $0x70] sm:$0xf]
    %v1772 = vld [vmem:[%s7 + $0x74] sm:$0xf]
    %v1773 = vld [vmem:[%s7 + $0x78] sm:$0xf]
    %v1774 = vld [vmem:[%s7 + $0x7c] sm:$0xf]
    %v1775 = vld [vmem:[%s7 + $0x80] sm:$0xf]
    %v1776 = vld [vmem:[%s7 + $0x84] sm:$0xf]
    %v1777 = vld [vmem:[%s7 + $0x88] sm:$0xf]
    %v1778 = vld [vmem:[%s7 + $0x8c] sm:$0xf]
    %v1779 = vld [vmem:[%s7 + $0x90] sm:$0xf]
    %v1780 = vld [vmem:[%s7 + $0x94] sm:$0xf]
    %v1781 = vld [vmem:[%s7 + $0x98] sm:$0xf]
    %v1782 = vld [vmem:[%s7 + $0x9c] sm:$0xf]
    %v1783 = vld [vmem:[%s7 + $0xa0] sm:$0xf]
    %v1784 = vld [vmem:[%s7 + $0xa4] sm:$0xf]
    %v1785 = vld [vmem:[%s7 + $0xa8] sm:$0xf]
    %v1786 = vld [vmem:[%s7 + $0xac] sm:$0xf]
    %v1787 = vld [vmem:[%s7 + $0xb0] sm:$0xf]
    %v1788 = vld [vmem:[%s7 + $0xb4] sm:$0xf]
    %v1789 = vld [vmem:[%s7 + $0xb8] sm:$0xf]
    %v1790 = vld [vmem:[%s7 + $0xbc] sm:$0xf]
    %v1791 = vld [vmem:[%s7 + $0xc0] sm:$0xf]
    %v1792 = vld [vmem:[%s7 + $0xc4] sm:$0xf]
    %v1793 = vld [vmem:[%s7 + $0xc8] sm:$0xf]
    %v1794 = vld [vmem:[%s7 + $0xcc] sm:$0xf]
    %v1795 = vld [vmem:[%s7 + $0xd0] sm:$0xf]
    %v1796 = vld [vmem:[%s7 + $0xd4] sm:$0xf]
    %v1797 = vld [vmem:[%s7 + $0xd8] sm:$0xf]
    %v1798 = vld [vmem:[%s7 + $0xdc] sm:$0xf]
    %v1799 = vld [vmem:[%s7 + $0xe0] sm:$0xf]
    %v1800 = vld [vmem:[%s7 + $0xe4] sm:$0xf]
    %v1801 = vld [vmem:[%s7 + $0xe8] sm:$0xf]
    %v1802 = vld [vmem:[%s7 + $0xec] sm:$0xf]
    %v1803 = vld [vmem:[%s7 + $0xf0] sm:$0xf]
    %v1804 = vld [vmem:[%s7 + $0xf4] sm:$0xf]
    %v1805 = vld [vmem:[%s7 + $0xf8] sm:$0xf]
    %v1806 = vld [vmem:[%s7 + $0xfc] sm:$0xf]
    %v1807 = vld [vmem:[%s8] sm:$0x1]
    %v1809 = vlaneseq
    %v1810 = vshrl.u32 %v1809, 7
    %v1811 = vsub.s32 0, %v1810
    %v1812 = vrot.slane %v1807, %v1811
    %v1878 = vunpack.c.l.b16 %v1743
    %v1879 = vunpack.c.l.b16 %v1744
    %v1880 = vunpack.c.l.b16 %v1745
    %v1881 = vunpack.c.l.b16 %v1746
    %v1882 = vunpack.c.l.b16 %v1747
    %v1883 = vunpack.c.l.b16 %v1748
    %v1884 = vunpack.c.l.b16 %v1749
    %v1885 = vunpack.c.l.b16 %v1750
    %v1886 = vunpack.c.l.b16 %v1751
    %v1887 = vunpack.c.l.b16 %v1752
    %v1888 = vunpack.c.l.b16 %v1753
    %v1889 = vunpack.c.l.b16 %v1754
    %v1890 = vunpack.c.l.b16 %v1755
    %v1891 = vunpack.c.l.b16 %v1756
    %v1892 = vunpack.c.l.b16 %v1757
    %v1893 = vunpack.c.l.b16 %v1758
    %v1894 = vunpack.c.l.b16 %v1759
    %v1895 = vunpack.c.l.b16 %v1760
    %v1896 = vunpack.c.l.b16 %v1761
    %v1897 = vunpack.c.l.b16 %v1762
    %v1898 = vunpack.c.l.b16 %v1763
    %v1899 = vunpack.c.l.b16 %v1764
    %v1900 = vunpack.c.l.b16 %v1765
    %v1901 = vunpack.c.l.b16 %v1766
    %v1902 = vunpack.c.l.b16 %v1767
    %v1903 = vunpack.c.l.b16 %v1768
    %v1904 = vunpack.c.l.b16 %v1769
    %v1905 = vunpack.c.l.b16 %v1770
    %v1906 = vunpack.c.l.b16 %v1771
    %v1907 = vunpack.c.l.b16 %v1772
    %v1908 = vunpack.c.l.b16 %v1773
    %v1909 = vunpack.c.l.b16 %v1774
    %v1910 = vunpack.c.l.b16 %v1775
    %v1911 = vunpack.c.l.b16 %v1776
    %v1912 = vunpack.c.l.b16 %v1777
    %v1913 = vunpack.c.l.b16 %v1778
    %v1914 = vunpack.c.l.b16 %v1779
    %v1915 = vunpack.c.l.b16 %v1780
    %v1916 = vunpack.c.l.b16 %v1781
    %v1917 = vunpack.c.l.b16 %v1782
    %v1918 = vunpack.c.l.b16 %v1783
    %v1919 = vunpack.c.l.b16 %v1784
    %v1920 = vunpack.c.l.b16 %v1785
    %v1921 = vunpack.c.l.b16 %v1786
    %v1922 = vunpack.c.l.b16 %v1787
    %v1923 = vunpack.c.l.b16 %v1788
    %v1924 = vunpack.c.l.b16 %v1789
    %v1925 = vunpack.c.l.b16 %v1790
    %v1926 = vunpack.c.l.b16 %v1791
    %v1927 = vunpack.c.l.b16 %v1792
    %v1928 = vunpack.c.l.b16 %v1793
    %v1929 = vunpack.c.l.b16 %v1794
    %v1930 = vunpack.c.l.b16 %v1795
    %v1931 = vunpack.c.l.b16 %v1796
    %v1932 = vunpack.c.l.b16 %v1797
    %v1933 = vunpack.c.l.b16 %v1798
    %v1934 = vunpack.c.l.b16 %v1799
    %v1935 = vunpack.c.l.b16 %v1800
    %v1936 = vunpack.c.l.b16 %v1801
    %v1937 = vunpack.c.l.b16 %v1802
    %v1938 = vunpack.c.l.b16 %v1803
    %v1939 = vunpack.c.l.b16 %v1804
    %v1940 = vunpack.c.l.b16 %v1805
    %v1941 = vunpack.c.l.b16 %v1806
    %v1942 = vpack.c.b16 %v1879, %v1878
    %v1943 = vpack.c.b16 %v1881, %v1880
    %v1944 = vpack.c.b16 %v1883, %v1882
    %v1945 = vpack.c.b16 %v1885, %v1884
    %v1946 = vpack.c.b16 %v1887, %v1886
    %v1947 = vpack.c.b16 %v1889, %v1888
    %v1948 = vpack.c.b16 %v1891, %v1890
    %v1949 = vpack.c.b16 %v1893, %v1892
    %v1950 = vpack.c.b16 %v1895, %v1894
    %v1951 = vpack.c.b16 %v1897, %v1896
    %v1952 = vpack.c.b16 %v1899, %v1898
    %v1953 = vpack.c.b16 %v1901, %v1900
    %v1954 = vpack.c.b16 %v1903, %v1902
    %v1955 = vpack.c.b16 %v1905, %v1904
    %v1956 = vpack.c.b16 %v1907, %v1906
    %v1957 = vpack.c.b16 %v1909, %v1908
    %v1958 = vpack.c.b16 %v1911, %v1910
    %v1959 = vpack.c.b16 %v1913, %v1912
    %v1960 = vpack.c.b16 %v1915, %v1914
    %v1961 = vpack.c.b16 %v1917, %v1916
    %v1962 = vpack.c.b16 %v1919, %v1918
    %v1963 = vpack.c.b16 %v1921, %v1920
    %v1964 = vpack.c.b16 %v1923, %v1922
    %v1965 = vpack.c.b16 %v1925, %v1924
    %v1966 = vpack.c.b16 %v1927, %v1926
    %v1967 = vpack.c.b16 %v1929, %v1928
    %v1968 = vpack.c.b16 %v1931, %v1930
    %v1969 = vpack.c.b16 %v1933, %v1932
    %v1970 = vpack.c.b16 %v1935, %v1934
    %v1971 = vpack.c.b16 %v1937, %v1936
    %v1972 = vpack.c.b16 %v1939, %v1938
    %v1973 = vpack.c.b16 %v1941, %v1940
    %2006 = vmatprep.subr.bf16.mxu0 0
    %2007 = vmatpush1.bf16.msra.mxu0 %v1942
    %2008 = vmatprep.subr.bf16.mxu0 0
    %2009 = vmatpush1.bf16.msra.mxu0 %v1943
    %2010 = vmatprep.subr.bf16.mxu0 0
    %2011 = vmatpush1.bf16.msra.mxu0 %v1944
    %2012 = vmatprep.subr.bf16.mxu0 0
    %2013 = vmatpush1.bf16.msra.mxu0 %v1945
    %2014 = vmatprep.subr.bf16.mxu0 0
    %2015 = vmatpush1.bf16.msra.mxu0 %v1946
    %2016 = vmatprep.subr.bf16.mxu0 0
    %2017 = vmatpush1.bf16.msra.mxu0 %v1947
    %2018 = vmatprep.subr.bf16.mxu0 0
    %2019 = vmatpush1.bf16.msra.mxu0 %v1948
    %2020 = vmatprep.subr.bf16.mxu0 0
    %2021 = vmatpush1.bf16.msra.mxu0 %v1949
    %2022 = vmatprep.subr.bf16.mxu0 0
    %2023 = vmatpush1.bf16.msra.mxu0 %v1950
    %2024 = vmatprep.subr.bf16.mxu0 0
    %2025 = vmatpush1.bf16.msra.mxu0 %v1951
    %2026 = vmatprep.subr.bf16.mxu0 0
    %2027 = vmatpush1.bf16.msra.mxu0 %v1952
    %2028 = vmatprep.subr.bf16.mxu0 0
    %2029 = vmatpush1.bf16.msra.mxu0 %v1953
    %2030 = vmatprep.subr.bf16.mxu0 0
    %2031 = vmatpush1.bf16.msra.mxu0 %v1954
    %2032 = vmatprep.subr.bf16.mxu0 0
    %2033 = vmatpush1.bf16.msra.mxu0 %v1955
    %2034 = vmatprep.subr.bf16.mxu0 0
    %2035 = vmatpush1.bf16.msra.mxu0 %v1956
    %2036 = vmatprep.subr.bf16.mxu0 0
    %2037 = vmatpush1.bf16.msra.mxu0 %v1957
    %2038 = vmatprep.mubr.bf16.mxu0 %v1740
    %2039 = vmatmul.mubr.bf16.gmra.mrb[0].mxu0 %v1739
    %v2040 = vpop.f32.mrb[0].mxu0
    %v2041 = vadd.f32 %v1812, %v2040
    %v2042 = vpop.f32.mrb[0].mxu0
    %v2043 = vpop.f32.mrb[0].mxu0
    %v2044 = vpop.f32.mrb[0].mxu0
    %2045 = vdwg.mxu0
    %2046 = vmatprep.subr.bf16.mxu0 0
    %2047 = vmatpush1.bf16.msra.mxu0 %v1958
    %2048 = vmatprep.subr.bf16.mxu0 0
    %2049 = vmatpush1.bf16.msra.mxu0 %v1959
    %2050 = vmatprep.subr.bf16.mxu0 0
    %2051 = vmatpush1.bf16.msra.mxu0 %v1960
    %2052 = vmatprep.subr.bf16.mxu0 0
    %2053 = vmatpush1.bf16.msra.mxu0 %v1961
    %2054 = vmatprep.subr.bf16.mxu0 0
    %2055 = vmatpush1.bf16.msra.mxu0 %v1962
    %2056 = vmatprep.subr.bf16.mxu0 0
    %2057 = vmatpush1.bf16.msra.mxu0 %v1963
    %2058 = vmatprep.subr.bf16.mxu0 0
    %2059 = vmatpush1.bf16.msra.mxu0 %v1964
    %2060 = vmatprep.subr.bf16.mxu0 0
    %2061 = vmatpush1.bf16.msra.mxu0 %v1965
    %2062 = vmatprep.subr.bf16.mxu0 0
    %2063 = vmatpush1.bf16.msra.mxu0 %v1966
    %2064 = vmatprep.subr.bf16.mxu0 0
    %2065 = vmatpush1.bf16.msra.mxu0 %v1967
    %2066 = vmatprep.subr.bf16.mxu0 0
    %2067 = vmatpush1.bf16.msra.mxu0 %v1968
    %2068 = vmatprep.subr.bf16.mxu0 0
    %2069 = vmatpush1.bf16.msra.mxu0 %v1969
    %2070 = vmatprep.subr.bf16.mxu0 0
    %2071 = vmatpush1.bf16.msra.mxu0 %v1970
    %2072 = vmatprep.subr.bf16.mxu0 0
    %2073 = vmatpush1.bf16.msra.mxu0 %v1971
    %2074 = vmatprep.subr.bf16.mxu0 0
    %2075 = vmatpush1.bf16.msra.mxu0 %v1972
    %2076 = vmatprep.subr.bf16.mxu0 0
    %2077 = vmatpush1.bf16.msra.mxu0 %v1973
    %2078 = vmatprep.mubr.bf16.mxu0 %v1742
    %2079 = vmatmul.mubr.bf16.gmra.mrb[0].mxu0 %v1741
    %v2080 = vpop.f32.mrb[0].mxu0
    %v2081 = vadd.f32 %v2041, %v2080
    %v2082 = vpop.f32.mrb[0].mxu0
    %v2083 = vpop.f32.mrb[0].mxu0
    %v2084 = vpop.f32.mrb[0].mxu0
    %2085 = vdwg.mxu0
    %2086 = vst [vmem:[#allocation3] sm:$0x3] %v2081
    // Predicated region
    $region38: #{forward.1} parent=1 // pred_check
      _
    $region39: #{forward.1} parent=1 // pred_check_branch
      %2088 = sbr.rel (0) target = $region41
    $region40: #{forward.1} parent=1 // pred_region
      %s2090 = ssub.s32 32, 32
      %2091 = vsyncadd [#allocation4], %s2090
      %s2093 = sshll.u32 [#allocation3], 4
      %s2094 = int_to_ptr.vmem [resolvable:$true] %s2093
      %2096 = dma.vmem_to_hbm [thread:$0]  %s2094, 32, %s9, [#allocation4]
    $region41: #{forward.1} parent=1 // pred_fallthru
      _
    // Predicated region
    $region42: #{forward.1} parent=1 // pred_check
      _
    $region43: #{forward.1} parent=1 // pred_check_branch
      %2098 = sbr.rel (0) target = $region45
    $region44: #{forward.1} parent=1 // pred_region
      %2099 = dma.done [#allocation4], 32
    $region45: #{forward.1} parent=1 // pred_fallthru
      _
    %2100 = vsyncpa [#allocation4], 1

</llo_original>
